<compile_context>
chip_gen: v7x
topology: tpu7x:2x2x1
jax: 0.10.0
libtpu: 0.0.40
codegen_flags: <defaults>
</compile_context>

<pallas_src>
import functools

import jax
import jax.numpy as jnp
from jax.experimental import pallas as pl
from jax.experimental.pallas import tpu as pltpu

_NEG = -1e30  # finite "-inf": masked lanes never create inf-inf NaNs


def attn_mil_kernel(
    x_ref,
    w1_ref, b1_ref,      # F_pad -> 256   (bf16 weight, f32 bias)
    w2_ref, b2_ref,      # 256   -> 128
    w3_ref, b3_ref,      # 128   -> 64 (L)
    wa1_ref, ba1_ref,    # 64    -> 64 (D)
    wa2_ref, ba2_ref,    # wa2 stored as a (1, 64) f32 row; ba2 is (1, 1)
    wc_ref, bc_ref,      # 64    -> C_pad (f32)
    yprob_ref, attn_ref,
    m_scr, l_scr, acc_scr,
    *, n_valid,
):
    i = pl.program_id(0)
    tile_n = x_ref.shape[0]

    @pl.when(i == 0)
    def _init():
        m_scr[...] = jnp.full_like(m_scr, _NEG)
        l_scr[...] = jnp.zeros_like(l_scr)
        acc_scr[...] = jnp.zeros_like(acc_scr)

    # ---- feature extractor: 3x (Linear -> ReLU); dropout = identity (eval) ----
    h = jnp.dot(x_ref[...].astype(jnp.bfloat16), w1_ref[...],
                preferred_element_type=jnp.float32) + b1_ref[...]
    h = jnp.maximum(h, 0.0)
    h = jnp.dot(h.astype(jnp.bfloat16), w2_ref[...],
                preferred_element_type=jnp.float32) + b2_ref[...]
    h = jnp.maximum(h, 0.0)
    h = jnp.dot(h.astype(jnp.bfloat16), w3_ref[...],
                preferred_element_type=jnp.float32) + b3_ref[...]
    h = jnp.maximum(h, 0.0)                                   # (tile_n, 64) f32

    # ---- attention scores, lane-dense: (1, tile_n) = wa2 (1,64) . a^T ----
    a = jnp.dot(h.astype(jnp.bfloat16), wa1_ref[...],
                preferred_element_type=jnp.float32) + ba1_ref[...]
    a = jnp.tanh(a)                                           # (tile_n, 64) f32
    s_row = jax.lax.dot_general(
        wa2_ref[...], a, (((1,), (1,)), ((), ())),
        preferred_element_type=jnp.float32) + ba2_ref[...]    # (1, tile_n)

    # mask instances that are pure padding (zero-filled rows past N)
    col = jax.lax.broadcasted_iota(jnp.int32, (1, tile_n), 1) + i * tile_n
    s_row = jnp.where(col < n_valid, s_row, _NEG)

    # ---- online softmax over the bag (flash-style running stats) ----
    m_prev = m_scr[...]                                       # (1, 1)
    m_new = jnp.maximum(m_prev, jnp.max(s_row, axis=-1, keepdims=True))
    alpha = jnp.exp(m_prev - m_new)                           # (1, 1)
    p_row = jnp.exp(s_row - m_new)                            # (1, tile_n); 0 on padding
    l_scr[...] = alpha * l_scr[...] + jnp.sum(p_row, axis=-1, keepdims=True)
    acc_scr[...] = alpha * acc_scr[...] + jnp.dot(
        p_row, h, preferred_element_type=jnp.float32)         # (1, 64)
    m_scr[...] = m_new

    # stash this tile's raw (masked) scores, lane-dense, in the resident output
    attn_ref[pl.ds(i, 1), :] = s_row

    # ---- epilogue: normalize attention, classify the bag embedding ----
    @pl.when(i == pl.num_programs(0) - 1)
    def _finalize():
        inv_l = pl.reciprocal(l_scr[...], approx=True)        # EUP slot, ~free
        attn_ref[...] = jnp.exp(attn_ref[...] - m_scr[...]) * inv_l
        m_bag = acc_scr[...] * inv_l                          # (1, 64) == A @ H
        yprob_ref[...] = jnp.dot(m_bag, wc_ref[...],
                                 preferred_element_type=jnp.float32) + bc_ref[...]


def _round_up(v, m):
    return (v + m - 1) // m * m


def attn_mil_forward(x, params, *, tile_n=512):
    """x: (N, in_features) f32. Returns (Y_prob (1, num_class), A (1, N))."""
    n, f = x.shape
    L = params["w3"].shape[1]
    D = params["wa1"].shape[1]
    c = params["wc"].shape[1]

    f_pad = _round_up(f, 128)                 # lane-align the first matmul's K
    c_pad = _round_up(c, 128)                 # lane-align classifier output
    tile_n = max(8, min(_round_up(tile_n, 8), _round_up(n, 8)))
    n_pad = _round_up(n, tile_n)
    num_tiles = n_pad // tile_n

    # zero-pad the bag; pad w1 rows to match; pre-cast matmul weights to bf16
    # once in the wrapper (avoids a per-grid-step cast of the resident blocks).
    x_p = jnp.pad(x, ((0, n_pad - n), (0, f_pad - f)))
    w1 = jnp.pad(params["w1"], ((0, f_pad - f), (0, 0))).astype(jnp.bfloat16)
    w2 = params["w2"].astype(jnp.bfloat16)
    w3 = params["w3"].astype(jnp.bfloat16)
    wa1 = params["wa1"].astype(jnp.bfloat16)
    wa2 = params["wa2"].reshape(1, D).astype(jnp.float32)     # (1, D) row (VPU/score path)
    wc = jnp.pad(params["wc"], ((0, 0), (0, c_pad - c)))
    bc = jnp.pad(params["bc"], ((0, 0), (0, c_pad - c)))

    rep = lambda i: (0, 0)                    # resident (un-tiled) operand
    in_specs = [
        pl.BlockSpec((tile_n, f_pad), lambda i: (i, 0)),      # x tile (pipelined)
        pl.BlockSpec((f_pad, 256), rep), pl.BlockSpec((1, 256), rep),
        pl.BlockSpec((256, 128), rep),   pl.BlockSpec((1, 128), rep),
        pl.BlockSpec((128, L), rep),     pl.BlockSpec((1, L), rep),
        pl.BlockSpec((L, D), rep),       pl.BlockSpec((1, D), rep),
        pl.BlockSpec((1, D), rep),       pl.BlockSpec((1, 1), rep),
        pl.BlockSpec((L, c_pad), rep),   pl.BlockSpec((1, c_pad), rep),
    ]
    out_specs = (
        pl.BlockSpec((1, c_pad), rep),                        # Y_prob (resident)
        pl.BlockSpec((num_tiles, tile_n), rep),               # attention (resident)
    )

    y_pad, attn_tiles = pl.pallas_call(
        functools.partial(attn_mil_kernel, n_valid=n),
        out_shape=(
            jax.ShapeDtypeStruct((1, c_pad), jnp.float32),
            jax.ShapeDtypeStruct((num_tiles, tile_n), jnp.float32),
        ),
        grid_spec=pltpu.PrefetchScalarGridSpec(
            num_scalar_prefetch=0,
            grid=(num_tiles,),
            in_specs=in_specs,
            out_specs=out_specs,
            scratch_shapes=[
                pltpu.VMEM((1, 1), jnp.float32),   # running max
                pltpu.VMEM((1, 1), jnp.float32),   # running sum(exp)
                pltpu.VMEM((1, L), jnp.float32),   # running exp(s-m) @ H
            ],
        ),
        compiler_params=pltpu.CompilerParams(
            dimension_semantics=("arbitrary",),    # bag reduction axis
            vmem_limit_bytes=48 * 1024 * 1024,     # explicit budget (v7x-safe)
        ),
    )(x_p, w1, params["b1"], w2, params["b2"], w3, params["b3"],
      wa1, params["ba1"], wa2, params["ba2"], wc, bc)

    y_prob = y_pad[:, :c]
    attn = attn_tiles.reshape(1, n_pad)[:, :n]    # row-major tiles == instance order
    return y_prob, attn


def attn_mil_reference(x, params):
    """Pure-JAX reference mirroring the kernel's bf16-matmul / f32-accumulate math."""
    def mm(a, w):
        return jnp.dot(a.astype(jnp.bfloat16), w.astype(jnp.bfloat16),
                       preferred_element_type=jnp.float32)
    h = jnp.maximum(mm(x, params["w1"]) + params["b1"], 0.0)
    h = jnp.maximum(mm(h, params["w2"]) + params["b2"], 0.0)
    h = jnp.maximum(mm(h, params["w3"]) + params["b3"], 0.0)
    a = jnp.tanh(mm(h, params["wa1"]) + params["ba1"])
    s = (jnp.dot(a, params["wa2"]) + params["ba2"])[:, 0]     # (N,) f32, like kernel
    attn = jax.nn.softmax(s)[None, :]                         # (1, N)
    m = attn @ h                                              # (1, 64)
    y = jnp.dot(m, params["wc"]) + params["bc"]               # (1, C)
    return y, attn


def init_params(key, in_features, num_class):
    """Deterministic synthetic parameters (PyTorch Linear shapes, stored transposed)."""
    L, D = 64, 64
    dims = [
        ("w1", (in_features, 256)), ("b1", (1, 256)),
        ("w2", (256, 128)),         ("b2", (1, 128)),
        ("w3", (128, L)),           ("b3", (1, L)),
        ("wa1", (L, D)),            ("ba1", (1, D)),
        ("wa2", (D, 1)),            ("ba2", (1, 1)),
        ("wc", (L, num_class)),     ("bc", (1, num_class)),
    ]
    params = {}
    for name, shape in dims:
        key, sub = jax.random.split(key)
        fan_in = shape[0] if name.startswith("w") else shape[1]
        bound = 1.0 / jnp.sqrt(jnp.float32(fan_in))
        params[name] = jax.random.uniform(
            sub, shape, dtype=jnp.float32, minval=-bound, maxval=bound
        )
    return params


if __name__ == "__main__":
    key = jax.random.PRNGKey(0)
    in_features = 32
    num_class = 3
    n_instances = 200   # with tile_n=128 -> 2 instance tiles + tail masking

    k_x, k_p = jax.random.split(key)
    x = jax.random.normal(k_x, (n_instances, in_features), dtype=jnp.float32)
    params = init_params(k_p, in_features, num_class)

    y_prob, attn = attn_mil_forward(x, params, tile_n=128)
    jax.block_until_ready((y_prob, attn))

    assert y_prob.shape == (1, num_class)
    assert attn.shape == (1, n_instances)

    y_exp, attn_exp = attn_mil_reference(x, params)
    assert jnp.allclose(y_prob, y_exp, rtol=3e-2, atol=3e-2)
    assert jnp.allclose(attn, attn_exp, rtol=3e-2, atol=1e-3)
    assert abs(float(jnp.sum(attn)) - 1.0) < 1e-2

    print("KERNEL_OK")
</pallas_src>

<mosaic_0001>
module attributes {stable_mosaic.version = 11 : i64} {
  func.func @attn_mil_kernel(%arg0: i32, %arg1: memref<128x128xf32, #tpu.memory_space<vmem>>, %arg2: memref<128x256xbf16, #tpu.memory_space<vmem>>, %arg3: memref<1x256xf32, #tpu.memory_space<vmem>>, %arg4: memref<256x128xbf16, #tpu.memory_space<vmem>>, %arg5: memref<1x128xf32, #tpu.memory_space<vmem>>, %arg6: memref<128x64xbf16, #tpu.memory_space<vmem>>, %arg7: memref<1x64xf32, #tpu.memory_space<vmem>>, %arg8: memref<64x64xbf16, #tpu.memory_space<vmem>>, %arg9: memref<1x64xf32, #tpu.memory_space<vmem>>, %arg10: memref<1x64xf32, #tpu.memory_space<vmem>>, %arg11: memref<1x1xf32, #tpu.memory_space<vmem>>, %arg12: memref<64x128xf32, #tpu.memory_space<vmem>>, %arg13: memref<1x128xf32, #tpu.memory_space<vmem>>, %arg14: memref<1x128xf32, #tpu.memory_space<vmem>>, %arg15: memref<2x128xf32, #tpu.memory_space<vmem>>, %arg16: memref<1x1xf32, #tpu.memory_space<vmem>>, %arg17: memref<1x1xf32, #tpu.memory_space<vmem>>, %arg18: memref<1x64xf32, #tpu.memory_space<vmem>>) attributes {dimension_semantics = [#tpu.dimension_semantics<arbitrary>], iteration_bounds = array<i64: 2>, scalar_prefetch = 0 : i64, scratch_operands = 3 : i64, tpu.core_type = #tpu.core_type<tc>, window_params = [{transform_indices = @transform_0, window_bounds = array<i64: 128, 128>}, {pipeline_mode = #tpu.pipeline_mode<synchronous>, transform_indices = @transform_1, window_bounds = array<i64: 128, 256>}, {pipeline_mode = #tpu.pipeline_mode<synchronous>, transform_indices = @transform_2, window_bounds = array<i64: 1, 256>}, {pipeline_mode = #tpu.pipeline_mode<synchronous>, transform_indices = @transform_3, window_bounds = array<i64: 256, 128>}, {pipeline_mode = #tpu.pipeline_mode<synchronous>, transform_indices = @transform_4, window_bounds = array<i64: 1, 128>}, {pipeline_mode = #tpu.pipeline_mode<synchronous>, transform_indices = @transform_5, window_bounds = array<i64: 128, 64>}, {pipeline_mode = #tpu.pipeline_mode<synchronous>, transform_indices = @transform_6, window_bounds = array<i64: 1, 64>}, {pipeline_mode = #tpu.pipeline_mode<synchronous>, transform_indices = @transform_7, window_bounds = array<i64: 64, 64>}, {pipeline_mode = #tpu.pipeline_mode<synchronous>, transform_indices = @transform_8, window_bounds = array<i64: 1, 64>}, {pipeline_mode = #tpu.pipeline_mode<synchronous>, transform_indices = @transform_9, window_bounds = array<i64: 1, 64>}, {pipeline_mode = #tpu.pipeline_mode<synchronous>, transform_indices = @transform_10, window_bounds = array<i64: 1, 1>}, {pipeline_mode = #tpu.pipeline_mode<synchronous>, transform_indices = @transform_11, window_bounds = array<i64: 64, 128>}, {pipeline_mode = #tpu.pipeline_mode<synchronous>, transform_indices = @transform_12, window_bounds = array<i64: 1, 128>}, {pipeline_mode = #tpu.pipeline_mode<synchronous>, transform_indices = @transform_13, window_bounds = array<i64: 1, 128>}, {pipeline_mode = #tpu.pipeline_mode<synchronous>, transform_indices = @transform_14, window_bounds = array<i64: 2, 128>}]} {
    %c0_i32 = arith.constant 0 : i32
    %0 = arith.cmpi eq, %arg0, %c0_i32 : i32
    %1 = arith.extui %0 : i1 to i32
    %c0_i32_0 = arith.constant 0 : i32
    %2 = arith.cmpi ne, %1, %c0_i32_0 : i32
    scf.if %2 {
      %cst_47 = arith.constant -1.000000e+30 : f32
      %75 = vector.broadcast %cst_47 : f32 to vector<1x1xf32>
      %c0_48 = arith.constant 0 : index
      %c0_49 = arith.constant 0 : index
      %76 = vector.load %arg16[%c0_48, %c0_49] : memref<1x1xf32, #tpu.memory_space<vmem>>, vector<1x1xf32>
      tpu.vector_store %arg16[%c0_48, %c0_49], %75 {strides = array<i32>} : memref<1x1xf32, #tpu.memory_space<vmem>>, vector<1x1xf32>,
      %cst_50 = arith.constant 0.000000e+00 : f32
      %77 = vector.broadcast %cst_50 : f32 to vector<1x1xf32>
      %c0_51 = arith.constant 0 : index
      %c0_52 = arith.constant 0 : index
      %78 = vector.load %arg17[%c0_51, %c0_52] : memref<1x1xf32, #tpu.memory_space<vmem>>, vector<1x1xf32>
      tpu.vector_store %arg17[%c0_51, %c0_52], %77 {strides = array<i32>} : memref<1x1xf32, #tpu.memory_space<vmem>>, vector<1x1xf32>,
      %cst_53 = arith.constant 0.000000e+00 : f32
      %79 = vector.broadcast %cst_53 : f32 to vector<1x64xf32>
      %c0_54 = arith.constant 0 : index
      %c0_55 = arith.constant 0 : index
      %80 = vector.load %arg18[%c0_54, %c0_55] : memref<1x64xf32, #tpu.memory_space<vmem>>, vector<1x64xf32>
      tpu.vector_store %arg18[%c0_54, %c0_55], %79 {strides = array<i32>} : memref<1x64xf32, #tpu.memory_space<vmem>>, vector<1x64xf32>,
    } else {
    }
    %c0 = arith.constant 0 : index
    %c0_1 = arith.constant 0 : index
    %3 = vector.load %arg1[%c0, %c0_1] : memref<128x128xf32, #tpu.memory_space<vmem>>, vector<128x128xf32>
    %4 = arith.truncf %3 : vector<128x128xf32> to vector<128x128xbf16>
    %c0_2 = arith.constant 0 : index
    %c0_3 = arith.constant 0 : index
    %5 = vector.load %arg2[%c0_2, %c0_3] : memref<128x256xbf16, #tpu.memory_space<vmem>>, vector<128x256xbf16>
    %cst = arith.constant dense<0.000000e+00> : vector<128x256xf32>
    %6 = tpu.matmul %4, %5, %cst {dimension_numbers = #tpu.dot_dimension_numbers<[1], [0], [0], [1], [0, 0, 1, 1], [], []>} : vector<128x128xbf16>, vector<128x256xbf16>, vector<128x256xf32> -> vector<128x256xf32>
    %c0_4 = arith.constant 0 : index
    %c0_5 = arith.constant 0 : index
    %7 = vector.load %arg3[%c0_4, %c0_5] : memref<1x256xf32, #tpu.memory_space<vmem>>, vector<1x256xf32>
    %8 = vector.broadcast %7 : vector<1x256xf32> to vector<128x256xf32>
    %9 = arith.addf %6, %8 : vector<128x256xf32>
    %cst_6 = arith.constant 0.000000e+00 : f32
    %10 = vector.broadcast %cst_6 : f32 to vector<128x256xf32>
    %11 = arith.maximumf %9, %10 : vector<128x256xf32>
    %12 = arith.truncf %11 : vector<128x256xf32> to vector<128x256xbf16>
    %c0_7 = arith.constant 0 : index
    %c0_8 = arith.constant 0 : index
    %13 = vector.load %arg4[%c0_7, %c0_8] : memref<256x128xbf16, #tpu.memory_space<vmem>>, vector<256x128xbf16>
    %cst_9 = arith.constant dense<0.000000e+00> : vector<128x128xf32>
    %14 = tpu.matmul %12, %13, %cst_9 {dimension_numbers = #tpu.dot_dimension_numbers<[1], [0], [0], [1], [0, 0, 1, 1], [], []>} : vector<128x256xbf16>, vector<256x128xbf16>, vector<128x128xf32> -> vector<128x128xf32>
    %c0_10 = arith.constant 0 : index
    %c0_11 = arith.constant 0 : index
    %15 = vector.load %arg5[%c0_10, %c0_11] : memref<1x128xf32, #tpu.memory_space<vmem>>, vector<1x128xf32>
    %16 = vector.broadcast %15 : vector<1x128xf32> to vector<128x128xf32>
    %17 = arith.addf %14, %16 : vector<128x128xf32>
    %cst_12 = arith.constant 0.000000e+00 : f32
    %18 = vector.broadcast %cst_12 : f32 to vector<128x128xf32>
    %19 = arith.maximumf %17, %18 : vector<128x128xf32>
    %20 = arith.truncf %19 : vector<128x128xf32> to vector<128x128xbf16>
    %c0_13 = arith.constant 0 : index
    %c0_14 = arith.constant 0 : index
    %21 = vector.load %arg6[%c0_13, %c0_14] : memref<128x64xbf16, #tpu.memory_space<vmem>>, vector<128x64xbf16>
    %cst_15 = arith.constant dense<0.000000e+00> : vector<128x64xf32>
    %22 = tpu.matmul %20, %21, %cst_15 {dimension_numbers = #tpu.dot_dimension_numbers<[1], [0], [0], [1], [0, 0, 1, 1], [], []>} : vector<128x128xbf16>, vector<128x64xbf16>, vector<128x64xf32> -> vector<128x64xf32>
    %c0_16 = arith.constant 0 : index
    %c0_17 = arith.constant 0 : index
    %23 = vector.load %arg7[%c0_16, %c0_17] : memref<1x64xf32, #tpu.memory_space<vmem>>, vector<1x64xf32>
    %24 = vector.broadcast %23 : vector<1x64xf32> to vector<128x64xf32>
    %25 = arith.addf %22, %24 : vector<128x64xf32>
    %cst_18 = arith.constant 0.000000e+00 : f32
    %26 = vector.broadcast %cst_18 : f32 to vector<128x64xf32>
    %27 = arith.maximumf %25, %26 : vector<128x64xf32>
    %28 = arith.truncf %27 : vector<128x64xf32> to vector<128x64xbf16>
    %c0_19 = arith.constant 0 : index
    %c0_20 = arith.constant 0 : index
    %29 = vector.load %arg8[%c0_19, %c0_20] : memref<64x64xbf16, #tpu.memory_space<vmem>>, vector<64x64xbf16>
    %cst_21 = arith.constant dense<0.000000e+00> : vector<128x64xf32>
    %30 = tpu.matmul %28, %29, %cst_21 {dimension_numbers = #tpu.dot_dimension_numbers<[1], [0], [0], [1], [0, 0, 1, 1], [], []>} : vector<128x64xbf16>, vector<64x64xbf16>, vector<128x64xf32> -> vector<128x64xf32>
    %c0_22 = arith.constant 0 : index
    %c0_23 = arith.constant 0 : index
    %31 = vector.load %arg9[%c0_22, %c0_23] : memref<1x64xf32, #tpu.memory_space<vmem>>, vector<1x64xf32>
    %32 = vector.broadcast %31 : vector<1x64xf32> to vector<128x64xf32>
    %33 = arith.addf %30, %32 : vector<128x64xf32>
    %34 = math.tanh %33 : vector<128x64xf32>
    %c0_24 = arith.constant 0 : index
    %c0_25 = arith.constant 0 : index
    %35 = vector.load %arg10[%c0_24, %c0_25] : memref<1x64xf32, #tpu.memory_space<vmem>>, vector<1x64xf32>
    %cst_26 = arith.constant dense<0.000000e+00> : vector<1x128xf32>
    %36 = tpu.matmul %35, %34, %cst_26 {dimension_numbers = #tpu.dot_dimension_numbers<[1], [1], [0], [0], [0, 0, 1, 0], [], []>} : vector<1x64xf32>, vector<128x64xf32>, vector<1x128xf32> -> vector<1x128xf32>
    %c0_27 = arith.constant 0 : index
    %c0_28 = arith.constant 0 : index
    %37 = vector.load %arg11[%c0_27, %c0_28] : memref<1x1xf32, #tpu.memory_space<vmem>>, vector<1x1xf32>
    %38 = vector.broadcast %37 : vector<1x1xf32> to vector<1x128xf32>
    %39 = arith.addf %36, %38 : vector<1x128xf32>
    %40 = tpu.iota {dimensions = array<i32: 1>} : vector<1x128xi32>
    %c128_i32 = arith.constant 128 : i32
    %41 = arith.muli %arg0, %c128_i32 : i32
    %42 = vector.broadcast %41 : i32 to vector<1x128xi32>
    %43 = arith.addi %40, %42 : vector<1x128xi32>
    %c200_i32 = arith.constant 200 : i32
    %44 = vector.broadcast %c200_i32 : i32 to vector<1x128xi32>
    %45 = arith.cmpi slt, %43, %44 : vector<1x128xi32>
    %cst_29 = arith.constant -1.000000e+30 : f32
    %46 = vector.broadcast %cst_29 : f32 to vector<1x128xf32>
    %47 = arith.select %45, %39, %46 : vector<1x128xi1>, vector<1x128xf32>
    %c0_30 = arith.constant 0 : index
    %c0_31 = arith.constant 0 : index
    %48 = vector.load %arg16[%c0_30, %c0_31] : memref<1x1xf32, #tpu.memory_space<vmem>>, vector<1x1xf32>
    %cst_32 = arith.constant dense<0xFF800000> : vector<1xf32>
    %49 = vector.multi_reduction <maximumf>, %47, %cst_32 [1] : vector<1x128xf32> to vector<1xf32>
    %50 = vector.shape_cast %49 : vector<1xf32> to vector<1x1xf32>
    %51 = arith.maximumf %48, %50 : vector<1x1xf32>
    %52 = arith.subf %48, %51 : vector<1x1xf32>
    %53 = math.exp %52 : vector<1x1xf32>
    %54 = vector.broadcast %51 : vector<1x1xf32> to vector<1x128xf32>
    %55 = arith.subf %47, %54 : vector<1x128xf32>
    %56 = math.exp %55 : vector<1x128xf32>
    %c0_33 = arith.constant 0 : index
    %c0_34 = arith.constant 0 : index
    %57 = vector.load %arg17[%c0_33, %c0_34] : memref<1x1xf32, #tpu.memory_space<vmem>>, vector<1x1xf32>
    %58 = arith.mulf %53, %57 : vector<1x1xf32>
    %cst_35 = arith.constant dense<0.000000e+00> : vector<1xf32>
    %59 = vector.multi_reduction <add>, %56, %cst_35 [1] : vector<1x128xf32> to vector<1xf32>
    %60 = vector.shape_cast %59 : vector<1xf32> to vector<1x1xf32>
    %61 = arith.addf %58, %60 : vector<1x1xf32>
    %c0_36 = arith.constant 0 : index
    %c0_37 = arith.constant 0 : index
    %62 = vector.load %arg17[%c0_36, %c0_37] : memref<1x1xf32, #tpu.memory_space<vmem>>, vector<1x1xf32>
    tpu.vector_store %arg17[%c0_36, %c0_37], %61 {strides = array<i32>} : memref<1x1xf32, #tpu.memory_space<vmem>>, vector<1x1xf32>,
    %c0_38 = arith.constant 0 : index
    %c0_39 = arith.constant 0 : index
    %63 = vector.load %arg18[%c0_38, %c0_39] : memref<1x64xf32, #tpu.memory_space<vmem>>, vector<1x64xf32>
    %64 = vector.broadcast %53 : vector<1x1xf32> to vector<1x64xf32>
    %65 = arith.mulf %64, %63 : vector<1x64xf32>
    %cst_40 = arith.constant dense<0.000000e+00> : vector<1x64xf32>
    %66 = tpu.matmul %56, %27, %cst_40 {dimension_numbers = #tpu.dot_dimension_numbers<[1], [0], [0], [1], [0, 0, 1, 1], [], []>} : vector<1x128xf32>, vector<128x64xf32>, vector<1x64xf32> -> vector<1x64xf32>
    %67 = arith.addf %65, %66 : vector<1x64xf32>
    %c0_41 = arith.constant 0 : index
    %c0_42 = arith.constant 0 : index
    %68 = vector.load %arg18[%c0_41, %c0_42] : memref<1x64xf32, #tpu.memory_space<vmem>>, vector<1x64xf32>
    tpu.vector_store %arg18[%c0_41, %c0_42], %67 {strides = array<i32>} : memref<1x64xf32, #tpu.memory_space<vmem>>, vector<1x64xf32>,
    %c0_43 = arith.constant 0 : index
    %c0_44 = arith.constant 0 : index
    %69 = vector.load %arg16[%c0_43, %c0_44] : memref<1x1xf32, #tpu.memory_space<vmem>>, vector<1x1xf32>
    tpu.vector_store %arg16[%c0_43, %c0_44], %51 {strides = array<i32>} : memref<1x1xf32, #tpu.memory_space<vmem>>, vector<1x1xf32>,
    %70 = arith.index_cast %arg0 : i32 to index
    %c0_45 = arith.constant 0 : index
    %71 = vector.load %arg15[%70, %c0_45] : memref<2x128xf32, #tpu.memory_space<vmem>>, vector<1x128xf32>
    tpu.vector_store %arg15[%70, %c0_45], %47 {strides = array<i32>} : memref<2x128xf32, #tpu.memory_space<vmem>>, vector<1x128xf32>,
    %c1_i32 = arith.constant 1 : i32
    %72 = arith.cmpi eq, %arg0, %c1_i32 : i32
    %73 = arith.extui %72 : i1 to i32
    %c0_i32_46 = arith.constant 0 : i32
    %74 = arith.cmpi ne, %73, %c0_i32_46 : i32
    scf.if %74 {
      %c0_47 = arith.constant 0 : index
      %c0_48 = arith.constant 0 : index
      %75 = vector.load %arg17[%c0_47, %c0_48] : memref<1x1xf32, #tpu.memory_space<vmem>>, vector<1x1xf32>
      %76 = tpu.reciprocal %75 {approx = true} : vector<1x1xf32> -> vector<1x1xf32>
      %c0_49 = arith.constant 0 : index
      %c0_50 = arith.constant 0 : index
      %77 = vector.load %arg15[%c0_49, %c0_50] : memref<2x128xf32, #tpu.memory_space<vmem>>, vector<2x128xf32>
      %c0_51 = arith.constant 0 : index
      %c0_52 = arith.constant 0 : index
      %78 = vector.load %arg16[%c0_51, %c0_52] : memref<1x1xf32, #tpu.memory_space<vmem>>, vector<1x1xf32>
      %79 = vector.broadcast %78 : vector<1x1xf32> to vector<2x128xf32>
      %80 = arith.subf %77, %79 : vector<2x128xf32>
      %81 = math.exp %80 : vector<2x128xf32>
      %82 = vector.broadcast %76 : vector<1x1xf32> to vector<2x128xf32>
      %83 = arith.mulf %81, %82 : vector<2x128xf32>
      %c0_53 = arith.constant 0 : index
      %c0_54 = arith.constant 0 : index
      %84 = vector.load %arg15[%c0_53, %c0_54] : memref<2x128xf32, #tpu.memory_space<vmem>>, vector<2x128xf32>
      tpu.vector_store %arg15[%c0_53, %c0_54], %83 {strides = array<i32>} : memref<2x128xf32, #tpu.memory_space<vmem>>, vector<2x128xf32>,
      %c0_55 = arith.constant 0 : index
      %c0_56 = arith.constant 0 : index
      %85 = vector.load %arg18[%c0_55, %c0_56] : memref<1x64xf32, #tpu.memory_space<vmem>>, vector<1x64xf32>
      %86 = vector.broadcast %76 : vector<1x1xf32> to vector<1x64xf32>
      %87 = arith.mulf %85, %86 : vector<1x64xf32>
      %c0_57 = arith.constant 0 : index
      %c0_58 = arith.constant 0 : index
      %88 = vector.load %arg12[%c0_57, %c0_58] : memref<64x128xf32, #tpu.memory_space<vmem>>, vector<64x128xf32>
      %cst_59 = arith.constant dense<0.000000e+00> : vector<1x128xf32>
      %89 = tpu.matmul %87, %88, %cst_59 {dimension_numbers = #tpu.dot_dimension_numbers<[1], [0], [0], [1], [0, 0, 1, 1], [], []>} : vector<1x64xf32>, vector<64x128xf32>, vector<1x128xf32> -> vector<1x128xf32>
      %c0_60 = arith.constant 0 : index
      %c0_61 = arith.constant 0 : index
      %90 = vector.load %arg13[%c0_60, %c0_61] : memref<1x128xf32, #tpu.memory_space<vmem>>, vector<1x128xf32>
      %91 = arith.addf %89, %90 : vector<1x128xf32>
      %c0_62 = arith.constant 0 : index
      %c0_63 = arith.constant 0 : index
      %92 = vector.load %arg14[%c0_62, %c0_63] : memref<1x128xf32, #tpu.memory_space<vmem>>, vector<1x128xf32>
      tpu.vector_store %arg14[%c0_62, %c0_63], %91 {strides = array<i32>} : memref<1x128xf32, #tpu.memory_space<vmem>>, vector<1x128xf32>,
    } else {
    }
    return
  }
  func.func @transform_0(%arg0: i32) -> (i32, i32) {
    %c0_i32 = arith.constant 0 : i32
    %c0_i32_0 = arith.constant 0 : i32
    return %arg0, %c0_i32 : i32, i32
  }
  func.func @transform_1(%arg0: i32) -> (i32, i32) {
    %c0_i32 = arith.constant 0 : i32
    %c0_i32_0 = arith.constant 0 : i32
    %c0_i32_1 = arith.constant 0 : i32
    return %c0_i32, %c0_i32_0 : i32, i32
  }
  func.func @transform_2(%arg0: i32) -> (i32, i32) {
    %c0_i32 = arith.constant 0 : i32
    %c0_i32_0 = arith.constant 0 : i32
    %c0_i32_1 = arith.constant 0 : i32
    return %c0_i32, %c0_i32_0 : i32, i32
  }
  func.func @transform_3(%arg0: i32) -> (i32, i32) {
    %c0_i32 = arith.constant 0 : i32
    %c0_i32_0 = arith.constant 0 : i32
    %c0_i32_1 = arith.constant 0 : i32
    return %c0_i32, %c0_i32_0 : i32, i32
  }
  func.func @transform_4(%arg0: i32) -> (i32, i32) {
    %c0_i32 = arith.constant 0 : i32
    %c0_i32_0 = arith.constant 0 : i32
    %c0_i32_1 = arith.constant 0 : i32
    return %c0_i32, %c0_i32_0 : i32, i32
  }
  func.func @transform_5(%arg0: i32) -> (i32, i32) {
    %c0_i32 = arith.constant 0 : i32
    %c0_i32_0 = arith.constant 0 : i32
    %c0_i32_1 = arith.constant 0 : i32
    return %c0_i32, %c0_i32_0 : i32, i32
  }
  func.func @transform_6(%arg0: i32) -> (i32, i32) {
    %c0_i32 = arith.constant 0 : i32
    %c0_i32_0 = arith.constant 0 : i32
    %c0_i32_1 = arith.constant 0 : i32
    return %c0_i32, %c0_i32_0 : i32, i32
  }
  func.func @transform_7(%arg0: i32) -> (i32, i32) {
    %c0_i32 = arith.constant 0 : i32
    %c0_i32_0 = arith.constant 0 : i32
    %c0_i32_1 = arith.constant 0 : i32
    return %c0_i32, %c0_i32_0 : i32, i32
  }
  func.func @transform_8(%arg0: i32) -> (i32, i32) {
    %c0_i32 = arith.constant 0 : i32
    %c0_i32_0 = arith.constant 0 : i32
    %c0_i32_1 = arith.constant 0 : i32
    return %c0_i32, %c0_i32_0 : i32, i32
  }
  func.func @transform_9(%arg0: i32) -> (i32, i32) {
    %c0_i32 = arith.constant 0 : i32
    %c0_i32_0 = arith.constant 0 : i32
    %c0_i32_1 = arith.constant 0 : i32
    return %c0_i32, %c0_i32_0 : i32, i32
  }
  func.func @transform_10(%arg0: i32) -> (i32, i32) {
    %c0_i32 = arith.constant 0 : i32
    %c0_i32_0 = arith.constant 0 : i32
    %c0_i32_1 = arith.constant 0 : i32
    return %c0_i32, %c0_i32_0 : i32, i32
  }
  func.func @transform_11(%arg0: i32) -> (i32, i32) {
    %c0_i32 = arith.constant 0 : i32
    %c0_i32_0 = arith.constant 0 : i32
    %c0_i32_1 = arith.constant 0 : i32
    return %c0_i32, %c0_i32_0 : i32, i32
  }
  func.func @transform_12(%arg0: i32) -> (i32, i32) {
    %c0_i32 = arith.constant 0 : i32
    %c0_i32_0 = arith.constant 0 : i32
    %c0_i32_1 = arith.constant 0 : i32
    return %c0_i32, %c0_i32_0 : i32, i32
  }
  func.func @transform_13(%arg0: i32) -> (i32, i32) {
    %c0_i32 = arith.constant 0 : i32
    %c0_i32_0 = arith.constant 0 : i32
    %c0_i32_1 = arith.constant 0 : i32
    return %c0_i32, %c0_i32_0 : i32, i32
  }
  func.func @transform_14(%arg0: i32) -> (i32, i32) {
    %c0_i32 = arith.constant 0 : i32
    %c0_i32_0 = arith.constant 0 : i32
    %c0_i32_1 = arith.constant 0 : i32
    return %c0_i32, %c0_i32_0 : i32, i32
  }
}

</mosaic_0001>

<llo_original>
// kernel: tpu_custom_call.1
$region0: #{tpu_custom_call.1}
  #allocation0 [shape = 'u32[]', space=smem, size = 0x4, offset = 0x4, fixed_abs, tag = 'smem constant byte address 0x4 - core index']
  #allocation1 [shape = 'u32[144,128]{1,0:T(1,128)}', space=vmem, size = 0x12000, scoped, tag = 'internal scratch']
  #allocation2 [shape = 'f32[1,1]{1,0:T(1,128)}', space=vmem, size = 0x200, scoped, tag = 'scratch operand']
  #allocation3 [shape = 'f32[1,1]{1,0:T(1,128)}', space=vmem, size = 0x200, scoped, tag = 'scratch operand']
  #allocation4 [shape = 'f32[1,64]{1,0:T(1,128)}', space=vmem, size = 0x200, scoped, tag = 'scratch operand']
  #allocation5 [shape = 'f32[1,1]{1,0:T(1,128)S(1)}', space=vmem, size = 0x200, scoped, tag = 'scoped memory for tpu_custom_call.1']
  %s0 = inlined_call_operand.hbm [shape: f32[256,128], index: 0, kind: input, shape index: {}]
  %s1 = inlined_call_operand.hbm [shape: bf16[128,256], index: 1, kind: input, shape index: {}]
  %s2 = inlined_call_operand.vmem [shape: f32[1,256], index: 2, kind: input, shape index: {}]
  %s3 = inlined_call_operand.hbm [shape: bf16[256,128], index: 3, kind: input, shape index: {}]
  %s4 = inlined_call_operand.vmem [shape: f32[1,128], index: 4, kind: input, shape index: {}]
  %s5 = inlined_call_operand.vmem [shape: bf16[128,64], index: 5, kind: input, shape index: {}]
  %s6 = inlined_call_operand.vmem [shape: f32[1,64], index: 6, kind: input, shape index: {}]
  %s7 = inlined_call_operand.vmem [shape: bf16[64,64], index: 7, kind: input, shape index: {}]
  %s8 = inlined_call_operand.vmem [shape: f32[1,64], index: 8, kind: input, shape index: {}]
  %s9 = inlined_call_operand.vmem [shape: f32[1,64], index: 9, kind: input, shape index: {}]
  %s10 = inlined_call_operand.<no memory space> [shape: f32[1,1], index: 10, kind: input, shape index: {}]
  %s11 = inlined_call_operand.vmem [shape: f32[64,128], index: 11, kind: input, shape index: {}]
  %s12 = inlined_call_operand.vmem [shape: f32[1,128], index: 12, kind: input, shape index: {}]
  %s13 = inlined_call_operand.hbm [shape: f32[1,128], index: 13, kind: output, shape index: {0}]
  %s14 = inlined_call_operand.hbm [shape: f32[2,128], index: 14, kind: output, shape index: {1}]
  %15 = xla_tuple %s13, %s14
  %s16 = sld [smem:[#allocation0]]
  $region113: #{tpu_custom_call.1} parent=0
    _
  %s18 = ssub.s32 1, %s16
  %s19 = scalar_select 0, %s18, %s16
  %v20 = vstv %s10
  %21 = vst [vmem:[#allocation5] sm:$0x1] %v20
  $region1: #{tpu_custom_call.1} parent=0
    #allocation6 [shape = 'u8[131072]{0}', space=vmem, size = 0x20000, scoped, tag = 'input window, operand 0']
    #allocation7 [shape = 's32[2]{0}', space=sflag, size = 0x8, scoped, tag = 'scoped memory for tpu_custom_call.1']
    #allocation8 [shape = 's32[2]{0}', space=sflag, size = 0x8, scoped, tag = 'scoped memory for tpu_custom_call.1']
    #allocation9 [shape = 'u8[65536]{0}', space=vmem, size = 0x10000, scoped, tag = 'input window, operand 1, single buffered']
    #allocation10 [shape = 's32[1]{0}', space=sflag, size = 0x4, scoped, tag = 'scoped memory for tpu_custom_call.1']
    #allocation11 [shape = 'u8[65536]{0}', space=vmem, size = 0x10000, scoped, tag = 'input window, operand 3, single buffered']
    #allocation12 [shape = 'u8[512]{0}', space=vmem, size = 0x400, scoped, tag = 'output window, operand 0, single buffered']
    #allocation13 [shape = 'u8[1024]{0}', space=vmem, size = 0x400, scoped, tag = 'output window, operand 1, single buffered']
    #allocation14 [shape = 's32[1]{0}', space=sflag, size = 0x4, scoped, tag = 'scoped memory for tpu_custom_call.1']
    %22 = vsyncpa [#allocation7], 0
    %s23 = scalar_lea.sflag [#allocation7], 1
    %24 = vsyncpa %s23, 0
    %25 = vsyncpa [#allocation10], 0
    %26 = vsyncpa [#allocation8], 0
    %27 = vsyncpa [#allocation14], 0
    loop: start=0, step=1, limit=4
    $region2: #{tpu_custom_call.1} parent=1 // loop_pre_header
      _
    $region3: #{tpu_custom_call.1} parent=1 // loop_header
      %s29 = sphi 0, %s33
      %p30 = scmp.ge.s32.totalorder %s29, 4
      %s39 = sphi 0, %s41
      %s42 = sphi 0, %s39
      %s43 = sphi 0, %s42
      %s59 = sphi 0, %s43
      %s63 = sphi 0, %s63
      %s65 = sphi 0, %s63
      %s66 = sphi 0, %s65
      %s80 = sphi 0, %s66
      %s84 = sphi 0, %s84
      %s86 = sphi 0, %s84
      %s87 = sphi 0, %s86
      %s101 = sphi 0, %s87
      %s105 = sphi 0, %s105
      %s107 = sphi 0, %s105
      %s108 = sphi 0, %s107
      %s122 = sphi 0, %s108
      %s126 = sphi 0, %s126
      %s128 = sphi 0, %s126
      %s129 = sphi 0, %s128
      %s143 = sphi 0, %s129
      %s147 = sphi 0, %s147
      %s149 = sphi 0, %s147
      %s150 = sphi 0, %s149
      %s164 = sphi 0, %s150
      %s168 = sphi 0, %s168
      %s170 = sphi 0, %s168
      %s171 = sphi 0, %s170
      %s185 = sphi 0, %s171
      %s189 = sphi 0, %s189
      %s191 = sphi 0, %s189
      %s192 = sphi 0, %s191
      %s206 = sphi 0, %s192
      %s210 = sphi 0, %s210
      %s212 = sphi 0, %s210
      %s213 = sphi 0, %s212
      %s227 = sphi 0, %s213
      %s231 = sphi 0, %s231
      %s233 = sphi 0, %s231
      %s234 = sphi 0, %s233
      %s248 = sphi 0, %s234
      %s252 = sphi 0, %s252
      %s254 = sphi 0, %s252
      %s255 = sphi 0, %s254
      %s269 = sphi 0, %s255
      %s273 = sphi 0, %s273
      %s275 = sphi 0, %s273
      %s276 = sphi 0, %s275
      %s290 = sphi 0, %s276
      %s294 = sphi 0, %s294
      %s296 = sphi 0, %s294
      %s297 = sphi 0, %s296
      %s311 = sphi 0, %s297
      %s315 = sphi 0, %s315
      %s317 = sphi 0, %s315
      %s318 = sphi 0, %s317
      %s332 = sphi 0, %s318
      %s336 = sphi 0, %s336
      %s338 = sphi 0, %s336
      %s339 = sphi 0, %s338
      %s353 = sphi 0, %s339
    $region4: #{tpu_custom_call.1} parent=1 // loop_header_branch
      %32 = sbr.rel (%p30) target = $region8
    $region5: #{tpu_custom_call.1} parent=1 // loop_body
      %s34 = ssub.s32 %s29, 1
      %s35 = ssub.s32 %s29, 2
      %s36 = sadd.s32 %s29, 1
      %s37 = ssub.s32 %s29, %s36
      %p38 = scmp.eq.s32.totalorder %s37, 0
      %s40 = sadd.s32 %s39, 1
      %s41 = scalar_select %p38, %s39, %s40
      %p44 = pneg %p38
      %p45 = scmp.eq.s32.totalorder %s29, 1
      %p46 = por %p44, %p45
      %p47 = scmp.ne.s32.totalorder %s39, %s42
      %p48 = scmp.eq.s32.totalorder %s29, 0
      %p49 = por %p47, %p48
      %p50 = scmp.ne.s32.totalorder %s39, %s42
      %p51 = scmp.eq.s32.totalorder %s34, 1
      %p52 = por %p50, %p51
      %p53 = scmp.ne.s32.totalorder %s42, %s43
      %p54 = scmp.eq.s32.totalorder %s34, 0
      %p55 = por %p53, %p54
      %p56 = scmp.ne.s32.totalorder %s42, %s43
      %p57 = scmp.eq.s32.totalorder %s35, 1
      %p58 = por %p56, %p57
      %p60 = scmp.ne.s32.totalorder %s43, %s59
      %p61 = scmp.eq.s32.totalorder %s35, 0
      %p62 = por %p60, %p61
      %s64 = sadd.s32 %s63, 1
      %p67 = scmp.eq.s32.totalorder %s29, 1
      %p68 = scmp.ne.s32.totalorder %s63, %s65
      %p69 = scmp.eq.s32.totalorder %s29, 0
      %p70 = por %p68, %p69
      %p71 = scmp.ne.s32.totalorder %s63, %s65
      %p72 = scmp.eq.s32.totalorder %s34, 1
      %p73 = por %p71, %p72
      %p74 = scmp.ne.s32.totalorder %s65, %s66
      %p75 = scmp.eq.s32.totalorder %s34, 0
      %p76 = por %p74, %p75
      %p77 = scmp.ne.s32.totalorder %s65, %s66
      %p78 = scmp.eq.s32.totalorder %s35, 1
      %p79 = por %p77, %p78
      %p81 = scmp.ne.s32.totalorder %s66, %s80
      %p82 = scmp.eq.s32.totalorder %s35, 0
      %p83 = por %p81, %p82
      %s85 = sadd.s32 %s84, 1
      %p88 = scmp.eq.s32.totalorder %s29, 1
      %p89 = scmp.ne.s32.totalorder %s84, %s86
      %p90 = scmp.eq.s32.totalorder %s29, 0
      %p91 = por %p89, %p90
      %p92 = scmp.ne.s32.totalorder %s84, %s86
      %p93 = scmp.eq.s32.totalorder %s34, 1
      %p94 = por %p92, %p93
      %p95 = scmp.ne.s32.totalorder %s86, %s87
      %p96 = scmp.eq.s32.totalorder %s34, 0
      %p97 = por %p95, %p96
      %p98 = scmp.ne.s32.totalorder %s86, %s87
      %p99 = scmp.eq.s32.totalorder %s35, 1
      %p100 = por %p98, %p99
      %p102 = scmp.ne.s32.totalorder %s87, %s101
      %p103 = scmp.eq.s32.totalorder %s35, 0
      %p104 = por %p102, %p103
      %s106 = sadd.s32 %s105, 1
      %p109 = scmp.eq.s32.totalorder %s29, 1
      %p110 = scmp.ne.s32.totalorder %s105, %s107
      %p111 = scmp.eq.s32.totalorder %s29, 0
      %p112 = por %p110, %p111
      %p113 = scmp.ne.s32.totalorder %s105, %s107
      %p114 = scmp.eq.s32.totalorder %s34, 1
      %p115 = por %p113, %p114
      %p116 = scmp.ne.s32.totalorder %s107, %s108
      %p117 = scmp.eq.s32.totalorder %s34, 0
      %p118 = por %p116, %p117
      %p119 = scmp.ne.s32.totalorder %s107, %s108
      %p120 = scmp.eq.s32.totalorder %s35, 1
      %p121 = por %p119, %p120
      %p123 = scmp.ne.s32.totalorder %s108, %s122
      %p124 = scmp.eq.s32.totalorder %s35, 0
      %p125 = por %p123, %p124
      %s127 = sadd.s32 %s126, 1
      %p130 = scmp.eq.s32.totalorder %s29, 1
      %p131 = scmp.ne.s32.totalorder %s126, %s128
      %p132 = scmp.eq.s32.totalorder %s29, 0
      %p133 = por %p131, %p132
      %p134 = scmp.ne.s32.totalorder %s126, %s128
      %p135 = scmp.eq.s32.totalorder %s34, 1
      %p136 = por %p134, %p135
      %p137 = scmp.ne.s32.totalorder %s128, %s129
      %p138 = scmp.eq.s32.totalorder %s34, 0
      %p139 = por %p137, %p138
      %p140 = scmp.ne.s32.totalorder %s128, %s129
      %p141 = scmp.eq.s32.totalorder %s35, 1
      %p142 = por %p140, %p141
      %p144 = scmp.ne.s32.totalorder %s129, %s143
      %p145 = scmp.eq.s32.totalorder %s35, 0
      %p146 = por %p144, %p145
      %s148 = sadd.s32 %s147, 1
      %p151 = scmp.eq.s32.totalorder %s29, 1
      %p152 = scmp.ne.s32.totalorder %s147, %s149
      %p153 = scmp.eq.s32.totalorder %s29, 0
      %p154 = por %p152, %p153
      %p155 = scmp.ne.s32.totalorder %s147, %s149
      %p156 = scmp.eq.s32.totalorder %s34, 1
      %p157 = por %p155, %p156
      %p158 = scmp.ne.s32.totalorder %s149, %s150
      %p159 = scmp.eq.s32.totalorder %s34, 0
      %p160 = por %p158, %p159
      %p161 = scmp.ne.s32.totalorder %s149, %s150
      %p162 = scmp.eq.s32.totalorder %s35, 1
      %p163 = por %p161, %p162
      %p165 = scmp.ne.s32.totalorder %s150, %s164
      %p166 = scmp.eq.s32.totalorder %s35, 0
      %p167 = por %p165, %p166
      %s169 = sadd.s32 %s168, 1
      %p172 = scmp.eq.s32.totalorder %s29, 1
      %p173 = scmp.ne.s32.totalorder %s168, %s170
      %p174 = scmp.eq.s32.totalorder %s29, 0
      %p175 = por %p173, %p174
      %p176 = scmp.ne.s32.totalorder %s168, %s170
      %p177 = scmp.eq.s32.totalorder %s34, 1
      %p178 = por %p176, %p177
      %p179 = scmp.ne.s32.totalorder %s170, %s171
      %p180 = scmp.eq.s32.totalorder %s34, 0
      %p181 = por %p179, %p180
      %p182 = scmp.ne.s32.totalorder %s170, %s171
      %p183 = scmp.eq.s32.totalorder %s35, 1
      %p184 = por %p182, %p183
      %p186 = scmp.ne.s32.totalorder %s171, %s185
      %p187 = scmp.eq.s32.totalorder %s35, 0
      %p188 = por %p186, %p187
      %s190 = sadd.s32 %s189, 1
      %p193 = scmp.eq.s32.totalorder %s29, 1
      %p194 = scmp.ne.s32.totalorder %s189, %s191
      %p195 = scmp.eq.s32.totalorder %s29, 0
      %p196 = por %p194, %p195
      %p197 = scmp.ne.s32.totalorder %s189, %s191
      %p198 = scmp.eq.s32.totalorder %s34, 1
      %p199 = por %p197, %p198
      %p200 = scmp.ne.s32.totalorder %s191, %s192
      %p201 = scmp.eq.s32.totalorder %s34, 0
      %p202 = por %p200, %p201
      %p203 = scmp.ne.s32.totalorder %s191, %s192
      %p204 = scmp.eq.s32.totalorder %s35, 1
      %p205 = por %p203, %p204
      %p207 = scmp.ne.s32.totalorder %s192, %s206
      %p208 = scmp.eq.s32.totalorder %s35, 0
      %p209 = por %p207, %p208
      %s211 = sadd.s32 %s210, 1
      %p214 = scmp.eq.s32.totalorder %s29, 1
      %p215 = scmp.ne.s32.totalorder %s210, %s212
      %p216 = scmp.eq.s32.totalorder %s29, 0
      %p217 = por %p215, %p216
      %p218 = scmp.ne.s32.totalorder %s210, %s212
      %p219 = scmp.eq.s32.totalorder %s34, 1
      %p220 = por %p218, %p219
      %p221 = scmp.ne.s32.totalorder %s212, %s213
      %p222 = scmp.eq.s32.totalorder %s34, 0
      %p223 = por %p221, %p222
      %p224 = scmp.ne.s32.totalorder %s212, %s213
      %p225 = scmp.eq.s32.totalorder %s35, 1
      %p226 = por %p224, %p225
      %p228 = scmp.ne.s32.totalorder %s213, %s227
      %p229 = scmp.eq.s32.totalorder %s35, 0
      %p230 = por %p228, %p229
      %s232 = sadd.s32 %s231, 1
      %p235 = scmp.eq.s32.totalorder %s29, 1
      %p236 = scmp.ne.s32.totalorder %s231, %s233
      %p237 = scmp.eq.s32.totalorder %s29, 0
      %p238 = por %p236, %p237
      %p239 = scmp.ne.s32.totalorder %s231, %s233
      %p240 = scmp.eq.s32.totalorder %s34, 1
      %p241 = por %p239, %p240
      %p242 = scmp.ne.s32.totalorder %s233, %s234
      %p243 = scmp.eq.s32.totalorder %s34, 0
      %p244 = por %p242, %p243
      %p245 = scmp.ne.s32.totalorder %s233, %s234
      %p246 = scmp.eq.s32.totalorder %s35, 1
      %p247 = por %p245, %p246
      %p249 = scmp.ne.s32.totalorder %s234, %s248
      %p250 = scmp.eq.s32.totalorder %s35, 0
      %p251 = por %p249, %p250
      %s253 = sadd.s32 %s252, 1
      %p256 = scmp.eq.s32.totalorder %s29, 1
      %p257 = scmp.ne.s32.totalorder %s252, %s254
      %p258 = scmp.eq.s32.totalorder %s29, 0
      %p259 = por %p257, %p258
      %p260 = scmp.ne.s32.totalorder %s252, %s254
      %p261 = scmp.eq.s32.totalorder %s34, 1
      %p262 = por %p260, %p261
      %p263 = scmp.ne.s32.totalorder %s254, %s255
      %p264 = scmp.eq.s32.totalorder %s34, 0
      %p265 = por %p263, %p264
      %p266 = scmp.ne.s32.totalorder %s254, %s255
      %p267 = scmp.eq.s32.totalorder %s35, 1
      %p268 = por %p266, %p267
      %p270 = scmp.ne.s32.totalorder %s255, %s269
      %p271 = scmp.eq.s32.totalorder %s35, 0
      %p272 = por %p270, %p271
      %s274 = sadd.s32 %s273, 1
      %p277 = scmp.eq.s32.totalorder %s29, 1
      %p278 = scmp.ne.s32.totalorder %s273, %s275
      %p279 = scmp.eq.s32.totalorder %s29, 0
      %p280 = por %p278, %p279
      %p281 = scmp.ne.s32.totalorder %s273, %s275
      %p282 = scmp.eq.s32.totalorder %s34, 1
      %p283 = por %p281, %p282
      %p284 = scmp.ne.s32.totalorder %s275, %s276
      %p285 = scmp.eq.s32.totalorder %s34, 0
      %p286 = por %p284, %p285
      %p287 = scmp.ne.s32.totalorder %s275, %s276
      %p288 = scmp.eq.s32.totalorder %s35, 1
      %p289 = por %p287, %p288
      %p291 = scmp.ne.s32.totalorder %s276, %s290
      %p292 = scmp.eq.s32.totalorder %s35, 0
      %p293 = por %p291, %p292
      %s295 = sadd.s32 %s294, 1
      %p298 = scmp.eq.s32.totalorder %s29, 1
      %p299 = scmp.ne.s32.totalorder %s294, %s296
      %p300 = scmp.eq.s32.totalorder %s29, 0
      %p301 = por %p299, %p300
      %p302 = scmp.ne.s32.totalorder %s294, %s296
      %p303 = scmp.eq.s32.totalorder %s34, 1
      %p304 = por %p302, %p303
      %p305 = scmp.ne.s32.totalorder %s296, %s297
      %p306 = scmp.eq.s32.totalorder %s34, 0
      %p307 = por %p305, %p306
      %p308 = scmp.ne.s32.totalorder %s296, %s297
      %p309 = scmp.eq.s32.totalorder %s35, 1
      %p310 = por %p308, %p309
      %p312 = scmp.ne.s32.totalorder %s297, %s311
      %p313 = scmp.eq.s32.totalorder %s35, 0
      %p314 = por %p312, %p313
      %s316 = sadd.s32 %s315, 1
      %p319 = scmp.eq.s32.totalorder %s29, 1
      %p320 = scmp.ne.s32.totalorder %s315, %s317
      %p321 = scmp.eq.s32.totalorder %s29, 0
      %p322 = por %p320, %p321
      %p323 = scmp.ne.s32.totalorder %s315, %s317
      %p324 = scmp.eq.s32.totalorder %s34, 1
      %p325 = por %p323, %p324
      %p326 = scmp.ne.s32.totalorder %s317, %s318
      %p327 = scmp.eq.s32.totalorder %s34, 0
      %p328 = por %p326, %p327
      %p329 = scmp.ne.s32.totalorder %s317, %s318
      %p330 = scmp.eq.s32.totalorder %s35, 1
      %p331 = por %p329, %p330
      %p333 = scmp.ne.s32.totalorder %s318, %s332
      %p334 = scmp.eq.s32.totalorder %s35, 0
      %p335 = por %p333, %p334
      %s337 = sadd.s32 %s336, 1
      %p340 = scmp.eq.s32.totalorder %s29, 1
      %p341 = scmp.ne.s32.totalorder %s336, %s338
      %p342 = scmp.eq.s32.totalorder %s29, 0
      %p343 = por %p341, %p342
      %p344 = scmp.ne.s32.totalorder %s336, %s338
      %p345 = scmp.eq.s32.totalorder %s34, 1
      %p346 = por %p344, %p345
      %p347 = scmp.ne.s32.totalorder %s338, %s339
      %p348 = scmp.eq.s32.totalorder %s34, 0
      %p349 = por %p347, %p348
      %p350 = scmp.ne.s32.totalorder %s338, %s339
      %p351 = scmp.eq.s32.totalorder %s35, 1
      %p352 = por %p350, %p351
      %p354 = scmp.ne.s32.totalorder %s339, %s353
      %p355 = scmp.eq.s32.totalorder %s35, 0
      %p356 = por %p354, %p355
      %p357 = scmp.le.s32.totalorder 1, %s29
      %p358 = scmp.lt.s32.totalorder %s29, 3
      %p359 = pnand %p357, %p358
      %p360 = pneg %p359
      // Predicated region
      $region9: #{tpu_custom_call.1} parent=5 // pred_check
        _
      $region10: #{tpu_custom_call.1} parent=5 // pred_check_branch
        %362 = sbr.rel (%p359) target = $region12
      $region11: #{tpu_custom_call.1} parent=5 // pred_region
        %s363 = ssub.s32 %s29, 1
        // Predicated region
        $region13: #{tpu_custom_call.1} parent=11 // pred_check
          %p364 = pneg %p76
        $region14: #{tpu_custom_call.1} parent=11 // pred_check_branch
          %366 = sbr.rel (%p364) target = $region16
        $region15: #{tpu_custom_call.1} parent=11 // pred_region
          %s368 = ssub.s32 2048, 2048
          %369 = vsyncadd [#allocation10], %s368
          %s370 = sshll.u32 [#allocation9], 4
          %s371 = int_to_ptr.vmem [resolvable:$true] %s370
          %376 = dma.hbm_to_vmem [thread:$0]  %s1, 2048, %s371, [#allocation10], 128, 128, 8
        $region16: #{tpu_custom_call.1} parent=11 // pred_fallthru
          _
        // Predicated region
        $region17: #{tpu_custom_call.1} parent=11 // pred_check
          %p377 = pneg %p97
        $region18: #{tpu_custom_call.1} parent=11 // pred_check_branch
          %379 = sbr.rel (%p377) target = $region20
        $region19: #{tpu_custom_call.1} parent=11 // pred_region
          _
        $region20: #{tpu_custom_call.1} parent=11 // pred_fallthru
          _
        // Predicated region
        $region21: #{tpu_custom_call.1} parent=11 // pred_check
          %p380 = pneg %p118
        $region22: #{tpu_custom_call.1} parent=11 // pred_check_branch
          %382 = sbr.rel (%p380) target = $region24
        $region23: #{tpu_custom_call.1} parent=11 // pred_region
          %s384 = ssub.s32 2048, 2048
          %385 = vsyncadd [#allocation10], %s384
          %s386 = sshll.u32 [#allocation11], 4
          %s387 = int_to_ptr.vmem [resolvable:$true] %s386
          %392 = dma.hbm_to_vmem [thread:$0]  %s3, 2048, %s387, [#allocation10], 64, 64, 4
        $region24: #{tpu_custom_call.1} parent=11 // pred_fallthru
          _
        // Predicated region
        $region25: #{tpu_custom_call.1} parent=11 // pred_check
          %p393 = pneg %p139
        $region26: #{tpu_custom_call.1} parent=11 // pred_check_branch
          %395 = sbr.rel (%p393) target = $region28
        $region27: #{tpu_custom_call.1} parent=11 // pred_region
          _
        $region28: #{tpu_custom_call.1} parent=11 // pred_fallthru
          _
        // Predicated region
        $region29: #{tpu_custom_call.1} parent=11 // pred_check
          %p396 = pneg %p160
        $region30: #{tpu_custom_call.1} parent=11 // pred_check_branch
          %398 = sbr.rel (%p396) target = $region32
        $region31: #{tpu_custom_call.1} parent=11 // pred_region
          _
        $region32: #{tpu_custom_call.1} parent=11 // pred_fallthru
          _
        // Predicated region
        $region33: #{tpu_custom_call.1} parent=11 // pred_check
          %p399 = pneg %p181
        $region34: #{tpu_custom_call.1} parent=11 // pred_check_branch
          %401 = sbr.rel (%p399) target = $region36
        $region35: #{tpu_custom_call.1} parent=11 // pred_region
          _
        $region36: #{tpu_custom_call.1} parent=11 // pred_fallthru
          _
        // Predicated region
        $region37: #{tpu_custom_call.1} parent=11 // pred_check
          %p402 = pneg %p202
        $region38: #{tpu_custom_call.1} parent=11 // pred_check_branch
          %404 = sbr.rel (%p402) target = $region40
        $region39: #{tpu_custom_call.1} parent=11 // pred_region
          _
        $region40: #{tpu_custom_call.1} parent=11 // pred_fallthru
          _
        // Predicated region
        $region41: #{tpu_custom_call.1} parent=11 // pred_check
          %p405 = pneg %p223
        $region42: #{tpu_custom_call.1} parent=11 // pred_check_branch
          %407 = sbr.rel (%p405) target = $region44
        $region43: #{tpu_custom_call.1} parent=11 // pred_region
          _
        $region44: #{tpu_custom_call.1} parent=11 // pred_fallthru
          _
        // Predicated region
        $region45: #{tpu_custom_call.1} parent=11 // pred_check
          %p408 = pneg %p244
        $region46: #{tpu_custom_call.1} parent=11 // pred_check_branch
          %410 = sbr.rel (%p408) target = $region48
        $region47: #{tpu_custom_call.1} parent=11 // pred_region
          _
        $region48: #{tpu_custom_call.1} parent=11 // pred_fallthru
          _
        // Predicated region
        $region49: #{tpu_custom_call.1} parent=11 // pred_check
          %p411 = pneg %p265
        $region50: #{tpu_custom_call.1} parent=11 // pred_check_branch
          %413 = sbr.rel (%p411) target = $region52
        $region51: #{tpu_custom_call.1} parent=11 // pred_region
          _
        $region52: #{tpu_custom_call.1} parent=11 // pred_fallthru
          _
        // Predicated region
        $region53: #{tpu_custom_call.1} parent=11 // pred_check
          %p414 = pneg %p286
        $region54: #{tpu_custom_call.1} parent=11 // pred_check_branch
          %416 = sbr.rel (%p414) target = $region56
        $region55: #{tpu_custom_call.1} parent=11 // pred_region
          _
        $region56: #{tpu_custom_call.1} parent=11 // pred_fallthru
          _
        // Predicated region
        $region57: #{tpu_custom_call.1} parent=11 // pred_check
          %p417 = pneg %p307
        $region58: #{tpu_custom_call.1} parent=11 // pred_check_branch
          %419 = sbr.rel (%p417) target = $region60
        $region59: #{tpu_custom_call.1} parent=11 // pred_region
          _
        $region60: #{tpu_custom_call.1} parent=11 // pred_fallthru
          _
      $region12: #{tpu_custom_call.1} parent=5 // pred_fallthru
        _
      %p420 = scmp.lt.s32.totalorder %s29, 2
      // Predicated region
      $region61: #{tpu_custom_call.1} parent=5 // pred_check
        %p421 = pneg %p420
      $region62: #{tpu_custom_call.1} parent=5 // pred_check_branch
        %423 = sbr.rel (%p421) target = $region64
      $region63: #{tpu_custom_call.1} parent=5 // pred_region
        // Predicated region
        $region65: #{tpu_custom_call.1} parent=63 // pred_check
          %p424 = pneg %p49
        $region66: #{tpu_custom_call.1} parent=63 // pred_check_branch
          %426 = sbr.rel (%p424) target = $region68
        $region67: #{tpu_custom_call.1} parent=63 // pred_region
          %s427 = sand.u32 %s39, 1
          %s428 = scalar_lea.sflag [#allocation7], %s427
          %s429 = sand.u32 %s39, 1
          %s430 = smul.addr %s429, 128
          %s431 = scalar_lea.vmem [#allocation6], %s430
          %s432 = smul.u32 16, %s29
          %s434 = ssub.s32 2048, 2048
          %435 = vsyncadd %s428, %s434
          %s436 = smul.addr %s432, 128
          %s437 = scalar_lea.hbm %s0, %s436
          %s438 = sshll.u32 %s431, 4
          %s439 = int_to_ptr.vmem [resolvable:$true] %s438
          %444 = dma.hbm_to_vmem [thread:$0]  %s437, 2048, %s439, %s428, 128, 128, 8
        $region68: #{tpu_custom_call.1} parent=63 // pred_fallthru
          _
      $region64: #{tpu_custom_call.1} parent=5 // pred_fallthru
        _
      %p445 = scmp.le.s32.totalorder 1, %s29
      %p446 = scmp.lt.s32.totalorder %s29, 3
      %p447 = pnand %p445, %p446
      %p448 = pneg %p447
      // Predicated region
      $region69: #{tpu_custom_call.1} parent=5 // pred_check
        _
      $region70: #{tpu_custom_call.1} parent=5 // pred_check_branch
        %450 = sbr.rel (%p447) target = $region72
      $region71: #{tpu_custom_call.1} parent=5 // pred_region
        %s451 = ssub.s32 %s29, 1
        %s452 = sand.u32 %s42, 1
        %s453 = scalar_lea.sflag [#allocation7], %s452
        %s454 = sand.u32 %s42, 1
        %s455 = smul.addr %s454, 128
        %s456 = scalar_lea.vmem [#allocation6], %s455
        // Predicated region
        $region73: #{tpu_custom_call.1} parent=71 // pred_check
          %p457 = pneg %p55
        $region74: #{tpu_custom_call.1} parent=71 // pred_check_branch
          %459 = sbr.rel (%p457) target = $region76
        $region75: #{tpu_custom_call.1} parent=71 // pred_region
          %460 = dma.done %s453, 2048
        $region76: #{tpu_custom_call.1} parent=71 // pred_fallthru
          _
        // Predicated region
        $region77: #{tpu_custom_call.1} parent=71 // pred_check
          %p461 = pneg %p76
        $region78: #{tpu_custom_call.1} parent=71 // pred_check_branch
          %463 = sbr.rel (%p461) target = $region80
        $region79: #{tpu_custom_call.1} parent=71 // pred_region
          %464 = dma.done [#allocation10], 2048
        $region80: #{tpu_custom_call.1} parent=71 // pred_fallthru
          _
        // Predicated region
        $region81: #{tpu_custom_call.1} parent=71 // pred_check
          %p465 = pneg %p118
        $region82: #{tpu_custom_call.1} parent=71 // pred_check_branch
          %467 = sbr.rel (%p465) target = $region84
        $region83: #{tpu_custom_call.1} parent=71 // pred_region
          %468 = dma.done [#allocation10], 2048
        $region84: #{tpu_custom_call.1} parent=71 // pred_fallthru
          _
        %s469 = sand.u32 %s42, 1
        %s470 = scalar_lea.sflag [#allocation7], %s469
        %s471 = sand.u32 %s42, 1
        %s472 = smul.addr %s471, 128
        %s473 = scalar_lea.vmem [#allocation6], %s472
        %p474 = pneg %p55
        %p475 = pneg %p52
        %p476 = pneg %p76
        %p477 = pneg %p73
        %p478 = pneg %p97
        %p479 = pneg %p94
        %p480 = pneg %p118
        %p481 = pneg %p115
        %p482 = pneg %p139
        %p483 = pneg %p136
        %p484 = pneg %p160
        %p485 = pneg %p157
        %p486 = pneg %p181
        %p487 = pneg %p178
        %p488 = pneg %p202
        %p489 = pneg %p199
        %p490 = pneg %p223
        %p491 = pneg %p220
        %p492 = pneg %p244
        %p493 = pneg %p241
        %p494 = pneg %p265
        %p495 = pneg %p262
        %p496 = pneg %p286
        %p497 = pneg %p283
        %p498 = pneg %p307
        %p499 = pneg %p304
        %p500 = pneg %p328
        %p501 = pneg %p325
        %p502 = pneg %p349
        %p503 = pneg %p346
        %s504 = smul.u32 16, %s34
        %p506 = scmp.eq.s32.totalorder %s34, 0
        // Predicated region
        $region85: #{tpu_custom_call.1} parent=71 // pred_check
          %p507 = pneg %p506
        $region86: #{tpu_custom_call.1} parent=71 // pred_check_branch
          %509 = sbr.rel (%p507) target = $region88
        $region87: #{tpu_custom_call.1} parent=71 // pred_region
          %vm510 = vcmask 0
          %511 = vst.msk [vmem:[#allocation2] sm:$0x1] %vm510, -1e+30
          %512 = vst.msk [vmem:[#allocation3] sm:$0x1] %vm510, 0.0
          %vm513 = vcmask 516096
          %514 = vst.msk [vmem:[#allocation4] sm:$0x1] %vm513, 0.0
        $region88: #{tpu_custom_call.1} parent=71 // pred_fallthru
          _
        %v515 = vld [vmem:[%s456] sm:$0xff]
        %v516 = vld [vmem:[%s456 + $0x8] sm:$0xff]
        %v517 = vld [vmem:[%s456 + $0x10] sm:$0xff]
        %v518 = vld [vmem:[%s456 + $0x18] sm:$0xff]
        %v519 = vld [vmem:[%s456 + $0x20] sm:$0xff]
        %v520 = vld [vmem:[%s456 + $0x28] sm:$0xff]
        %v521 = vld [vmem:[%s456 + $0x30] sm:$0xff]
        %v522 = vld [vmem:[%s456 + $0x38] sm:$0xff]
        %v523 = vld [vmem:[%s456 + $0x40] sm:$0xff]
        %v524 = vld [vmem:[%s456 + $0x48] sm:$0xff]
        %v525 = vld [vmem:[%s456 + $0x50] sm:$0xff]
        %v526 = vld [vmem:[%s456 + $0x58] sm:$0xff]
        %v527 = vld [vmem:[%s456 + $0x60] sm:$0xff]
        %v528 = vld [vmem:[%s456 + $0x68] sm:$0xff]
        %v529 = vld [vmem:[%s456 + $0x70] sm:$0xff]
        %v530 = vld [vmem:[%s456 + $0x78] sm:$0xff]
        %v531 = vpack.c.bf16 %v516, %v515
        %v532 = vpack.c.bf16 %v518, %v517
        %v533 = vpack.c.bf16 %v520, %v519
        %v534 = vpack.c.bf16 %v522, %v521
        %v535 = vpack.c.bf16 %v524, %v523
        %v536 = vpack.c.bf16 %v526, %v525
        %v537 = vpack.c.bf16 %v528, %v527
        %v538 = vpack.c.bf16 %v530, %v529
        %v539 = vld [vmem:[#allocation9] sm:$0xff]
        %v540 = vld [vmem:[#allocation9 + $0x8] sm:$0xff]
        %v541 = vld [vmem:[#allocation9 + $0x10] sm:$0xff]
        %v542 = vld [vmem:[#allocation9 + $0x18] sm:$0xff]
        %v543 = vld [vmem:[#allocation9 + $0x20] sm:$0xff]
        %v544 = vld [vmem:[#allocation9 + $0x28] sm:$0xff]
        %v545 = vld [vmem:[#allocation9 + $0x30] sm:$0xff]
        %v546 = vld [vmem:[#allocation9 + $0x38] sm:$0xff]
        %v547 = vld [vmem:[#allocation9 + $0x40] sm:$0xff]
        %v548 = vld [vmem:[#allocation9 + $0x48] sm:$0xff]
        %v549 = vld [vmem:[#allocation9 + $0x50] sm:$0xff]
        %v550 = vld [vmem:[#allocation9 + $0x58] sm:$0xff]
        %v551 = vld [vmem:[#allocation9 + $0x60] sm:$0xff]
        %v552 = vld [vmem:[#allocation9 + $0x68] sm:$0xff]
        %v553 = vld [vmem:[#allocation9 + $0x70] sm:$0xff]
        %v554 = vld [vmem:[#allocation9 + $0x78] sm:$0xff]
        %v555 = vld [vmem:[%s2] sm:$0x3]
        %v557 = vlaneseq
        %v558 = vshrl.u32 %v557, 7
        %v559 = vsub.s32 0, %v558
        %v560 = vrot.slane %v555, %v559
        %v561 = vlaneseq
        %v562 = vshrl.u32 %v561, 7
        %v563 = vsub.s32 1, %v562
        %v564 = vrot.slane %v555, %v563
        %v583 = vunpack.c.l.b16 %v539
        %v584 = vunpack.c.h.b16 %v539
        %v585 = vunpack.c.l.b16 %v540
        %v586 = vunpack.c.h.b16 %v540
        %v587 = vunpack.c.l.b16 %v541
        %v588 = vunpack.c.h.b16 %v541
        %v589 = vunpack.c.l.b16 %v542
        %v590 = vunpack.c.h.b16 %v542
        %v591 = vunpack.c.l.b16 %v543
        %v592 = vunpack.c.h.b16 %v543
        %v593 = vunpack.c.l.b16 %v544
        %v594 = vunpack.c.h.b16 %v544
        %v595 = vunpack.c.l.b16 %v545
        %v596 = vunpack.c.h.b16 %v545
        %v597 = vunpack.c.l.b16 %v546
        %v598 = vunpack.c.h.b16 %v546
        %v599 = vunpack.c.l.b16 %v547
        %v600 = vunpack.c.h.b16 %v547
        %v601 = vunpack.c.l.b16 %v548
        %v602 = vunpack.c.h.b16 %v548
        %v603 = vunpack.c.l.b16 %v549
        %v604 = vunpack.c.h.b16 %v549
        %v605 = vunpack.c.l.b16 %v550
        %v606 = vunpack.c.h.b16 %v550
        %v607 = vunpack.c.l.b16 %v551
        %v608 = vunpack.c.h.b16 %v551
        %v609 = vunpack.c.l.b16 %v552
        %v610 = vunpack.c.h.b16 %v552
        %v611 = vunpack.c.l.b16 %v553
        %v612 = vunpack.c.h.b16 %v553
        %v613 = vunpack.c.l.b16 %v554
        %v614 = vunpack.c.h.b16 %v554
        %v615 = vpack.c.b16 %v585, %v583
        %v616 = vpack.c.b16 %v586, %v584
        %v617 = vpack.c.b16 %v589, %v587
        %v618 = vpack.c.b16 %v590, %v588
        %v619 = vpack.c.b16 %v593, %v591
        %v620 = vpack.c.b16 %v594, %v592
        %v621 = vpack.c.b16 %v597, %v595
        %v622 = vpack.c.b16 %v598, %v596
        %v623 = vpack.c.b16 %v601, %v599
        %v624 = vpack.c.b16 %v602, %v600
        %v625 = vpack.c.b16 %v605, %v603
        %v626 = vpack.c.b16 %v606, %v604
        %v627 = vpack.c.b16 %v609, %v607
        %v628 = vpack.c.b16 %v610, %v608
        %v629 = vpack.c.b16 %v613, %v611
        %v630 = vpack.c.b16 %v614, %v612
        %647 = vmatprep.subr.bf16.mxu0 %v616
        %648 = vmatpush1.bf16.msra.mxu0 %v615
        %649 = vmatprep.subr.bf16.mxu0 %v618
        %650 = vmatpush1.bf16.msra.mxu0 %v617
        %651 = vmatprep.subr.bf16.mxu0 %v620
        %652 = vmatpush1.bf16.msra.mxu0 %v619
        %653 = vmatprep.subr.bf16.mxu0 %v622
        %654 = vmatpush1.bf16.msra.mxu0 %v621
        %655 = vmatprep.subr.bf16.mxu0 %v624
        %656 = vmatpush1.bf16.msra.mxu0 %v623
        %657 = vmatprep.subr.bf16.mxu0 %v626
        %658 = vmatpush1.bf16.msra.mxu0 %v625
        %659 = vmatprep.subr.bf16.mxu0 %v628
        %660 = vmatpush1.bf16.msra.mxu0 %v627
        %661 = vmatprep.subr.bf16.mxu0 %v630
        %662 = vmatpush1.bf16.msra.mxu0 %v629
        %663 = vmatprep.subr.bf16.mxu0 0
        %664 = vmatpush1.bf16.msra.mxu0 0
        %665 = vmatprep.subr.bf16.mxu0 0
        %666 = vmatpush1.bf16.msra.mxu0 0
        %667 = vmatprep.subr.bf16.mxu0 0
        %668 = vmatpush1.bf16.msra.mxu0 0
        %669 = vmatprep.subr.bf16.mxu0 0
        %670 = vmatpush1.bf16.msra.mxu0 0
        %671 = vmatprep.subr.bf16.mxu0 0
        %672 = vmatpush1.bf16.msra.mxu0 0
        %673 = vmatprep.subr.bf16.mxu0 0
        %674 = vmatpush1.bf16.msra.mxu0 0
        %675 = vmatprep.subr.bf16.mxu0 0
        %676 = vmatpush1.bf16.msra.mxu0 0
        %677 = vmatprep.subr.bf16.mxu0 0
        %678 = vmatpush1.bf16.msra.mxu0 0
        %679 = vmatprep.mubr.bf16.mxu0 0
        %680 = vmatmul.mubr.bf16.gmra.mrb[0].mxu0 %v531
        %v681 = vpop.f32.mrb[0].mxu0
        %v682 = vadd.f32 %v560, %v681
        %v683 = vpop.f32.mrb[0].mxu0
        %v684 = vadd.f32 %v564, %v683
        %v685 = vpop.f32.mrb[0].mxu0
        %v686 = vadd.f32 %v560, %v685
        %v687 = vpop.f32.mrb[0].mxu0
        %v688 = vadd.f32 %v564, %v687
        %689 = vmatprep.mubr.bf16.mxu0 0
        %690 = vmatmul.mubr.bf16.gmra.mrb[0].mxu0 %v532
        %v691 = vpop.f32.mrb[0].mxu0
        %v692 = vadd.f32 %v560, %v691
        %v693 = vpop.f32.mrb[0].mxu0
        %v694 = vadd.f32 %v564, %v693
        %v695 = vpop.f32.mrb[0].mxu0
        %v696 = vadd.f32 %v560, %v695
        %v697 = vpop.f32.mrb[0].mxu0
        %v698 = vadd.f32 %v564, %v697
        %699 = vmatprep.mubr.bf16.mxu0 0
        %700 = vmatmul.mubr.bf16.gmra.mrb[0].mxu0 %v533
        %v701 = vpop.f32.mrb[0].mxu0
        %v702 = vadd.f32 %v560, %v701
        %v703 = vpop.f32.mrb[0].mxu0
        %v704 = vadd.f32 %v564, %v703
        %v705 = vpop.f32.mrb[0].mxu0
        %v706 = vadd.f32 %v560, %v705
        %v707 = vpop.f32.mrb[0].mxu0
        %v708 = vadd.f32 %v564, %v707
        %709 = vmatprep.mubr.bf16.mxu0 0
        %710 = vmatmul.mubr.bf16.gmra.mrb[0].mxu0 %v534
        %v711 = vpop.f32.mrb[0].mxu0
        %v712 = vadd.f32 %v560, %v711
        %v713 = vpop.f32.mrb[0].mxu0
        %v714 = vadd.f32 %v564, %v713
        %v715 = vpop.f32.mrb[0].mxu0
        %v716 = vadd.f32 %v560, %v715
        %v717 = vpop.f32.mrb[0].mxu0
        %v718 = vadd.f32 %v564, %v717
        %719 = vmatprep.mubr.bf16.mxu0 0
        %720 = vmatmul.mubr.bf16.gmra.mrb[0].mxu0 %v535
        %v721 = vpop.f32.mrb[0].mxu0
        %v722 = vadd.f32 %v560, %v721
        %v723 = vpop.f32.mrb[0].mxu0
        %v724 = vadd.f32 %v564, %v723
        %v725 = vpop.f32.mrb[0].mxu0
        %v726 = vadd.f32 %v560, %v725
        %v727 = vpop.f32.mrb[0].mxu0
        %v728 = vadd.f32 %v564, %v727
        %729 = vmatprep.mubr.bf16.mxu0 0
        %730 = vmatmul.mubr.bf16.gmra.mrb[0].mxu0 %v536
        %v731 = vpop.f32.mrb[0].mxu0
        %v732 = vadd.f32 %v560, %v731
        %v733 = vpop.f32.mrb[0].mxu0
        %v734 = vadd.f32 %v564, %v733
        %v735 = vpop.f32.mrb[0].mxu0
        %v736 = vadd.f32 %v560, %v735
        %v737 = vpop.f32.mrb[0].mxu0
        %v738 = vadd.f32 %v564, %v737
        %739 = vmatprep.mubr.bf16.mxu0 0
        %740 = vmatmul.mubr.bf16.gmra.mrb[0].mxu0 %v537
        %v741 = vpop.f32.mrb[0].mxu0
        %v742 = vadd.f32 %v560, %v741
        %v743 = vpop.f32.mrb[0].mxu0
        %v744 = vadd.f32 %v564, %v743
        %v745 = vpop.f32.mrb[0].mxu0
        %v746 = vadd.f32 %v560, %v745
        %v747 = vpop.f32.mrb[0].mxu0
        %v748 = vadd.f32 %v564, %v747
        %749 = vmatprep.mubr.bf16.mxu0 0
        %750 = vmatmul.mubr.bf16.gmra.mrb[0].mxu0 %v538
        %v751 = vpop.f32.mrb[0].mxu0
        %v752 = vadd.f32 %v560, %v751
        %v753 = vpop.f32.mrb[0].mxu0
        %v754 = vadd.f32 %v564, %v753
        %v755 = vpop.f32.mrb[0].mxu0
        %v756 = vadd.f32 %v560, %v755
        %v757 = vpop.f32.mrb[0].mxu0
        %v758 = vadd.f32 %v564, %v757
        %759 = vdwg.mxu0
        %v760 = vmax.f32 %v682, 0.0
        %v761 = vmax.f32 %v684, 0.0
        %v762 = vmax.f32 %v686, 0.0
        %v763 = vmax.f32 %v688, 0.0
        %v764 = vmax.f32 %v692, 0.0
        %v765 = vmax.f32 %v694, 0.0
        %v766 = vmax.f32 %v696, 0.0
        %v767 = vmax.f32 %v698, 0.0
        %v768 = vmax.f32 %v702, 0.0
        %v769 = vmax.f32 %v704, 0.0
        %v770 = vmax.f32 %v706, 0.0
        %v771 = vmax.f32 %v708, 0.0
        %v772 = vmax.f32 %v712, 0.0
        %v773 = vmax.f32 %v714, 0.0
        %v774 = vmax.f32 %v716, 0.0
        %v775 = vmax.f32 %v718, 0.0
        %v776 = vmax.f32 %v722, 0.0
        %v777 = vmax.f32 %v724, 0.0
        %v778 = vmax.f32 %v726, 0.0
        %v779 = vmax.f32 %v728, 0.0
        %v780 = vmax.f32 %v732, 0.0
        %v781 = vmax.f32 %v734, 0.0
        %v782 = vmax.f32 %v736, 0.0
        %v783 = vmax.f32 %v738, 0.0
        %v784 = vmax.f32 %v742, 0.0
        %v785 = vmax.f32 %v744, 0.0
        %v786 = vmax.f32 %v746, 0.0
        %v787 = vmax.f32 %v748, 0.0
        %v788 = vmax.f32 %v752, 0.0
        %v789 = vmax.f32 %v754, 0.0
        %v790 = vmax.f32 %v756, 0.0
        %v791 = vmax.f32 %v758, 0.0
        %v792 = vpack.c.bf16 %v762, %v760
        %v793 = vpack.c.bf16 %v763, %v761
        %v794 = vpack.c.bf16 %v766, %v764
        %v795 = vpack.c.bf16 %v767, %v765
        %v796 = vpack.c.bf16 %v770, %v768
        %v797 = vpack.c.bf16 %v771, %v769
        %v798 = vpack.c.bf16 %v774, %v772
        %v799 = vpack.c.bf16 %v775, %v773
        %v800 = vpack.c.bf16 %v778, %v776
        %v801 = vpack.c.bf16 %v779, %v777
        %v802 = vpack.c.bf16 %v782, %v780
        %v803 = vpack.c.bf16 %v783, %v781
        %v804 = vpack.c.bf16 %v786, %v784
        %v805 = vpack.c.bf16 %v787, %v785
        %v806 = vpack.c.bf16 %v790, %v788
        %v807 = vpack.c.bf16 %v791, %v789
        %v808 = vld [vmem:[#allocation11] sm:$0xf]
        %v809 = vld [vmem:[#allocation11 + $0x4] sm:$0xf]
        %v810 = vld [vmem:[#allocation11 + $0x8] sm:$0xf]
        %v811 = vld [vmem:[#allocation11 + $0xc] sm:$0xf]
        %v812 = vld [vmem:[#allocation11 + $0x10] sm:$0xf]
        %v813 = vld [vmem:[#allocation11 + $0x14] sm:$0xf]
        %v814 = vld [vmem:[#allocation11 + $0x18] sm:$0xf]
        %v815 = vld [vmem:[#allocation11 + $0x1c] sm:$0xf]
        %v816 = vld [vmem:[#allocation11 + $0x20] sm:$0xf]
        %v817 = vld [vmem:[#allocation11 + $0x24] sm:$0xf]
        %v818 = vld [vmem:[#allocation11 + $0x28] sm:$0xf]
        %v819 = vld [vmem:[#allocation11 + $0x2c] sm:$0xf]
        %v820 = vld [vmem:[#allocation11 + $0x30] sm:$0xf]
        %v821 = vld [vmem:[#allocation11 + $0x34] sm:$0xf]
        %v822 = vld [vmem:[#allocation11 + $0x38] sm:$0xf]
        %v823 = vld [vmem:[#allocation11 + $0x3c] sm:$0xf]
        %v824 = vld [vmem:[#allocation11 + $0x40] sm:$0xf]
        %v825 = vld [vmem:[#allocation11 + $0x44] sm:$0xf]
        %v826 = vld [vmem:[#allocation11 + $0x48] sm:$0xf]
        %v827 = vld [vmem:[#allocation11 + $0x4c] sm:$0xf]
        %v828 = vld [vmem:[#allocation11 + $0x50] sm:$0xf]
        %v829 = vld [vmem:[#allocation11 + $0x54] sm:$0xf]
        %v830 = vld [vmem:[#allocation11 + $0x58] sm:$0xf]
        %v831 = vld [vmem:[#allocation11 + $0x5c] sm:$0xf]
        %v832 = vld [vmem:[#allocation11 + $0x60] sm:$0xf]
        %v833 = vld [vmem:[#allocation11 + $0x64] sm:$0xf]
        %v834 = vld [vmem:[#allocation11 + $0x68] sm:$0xf]
        %v835 = vld [vmem:[#allocation11 + $0x6c] sm:$0xf]
        %v836 = vld [vmem:[#allocation11 + $0x70] sm:$0xf]
        %v837 = vld [vmem:[#allocation11 + $0x74] sm:$0xf]
        %v838 = vld [vmem:[#allocation11 + $0x78] sm:$0xf]
        %v839 = vld [vmem:[#allocation11 + $0x7c] sm:$0xf]
        %v840 = vld [vmem:[%s4] sm:$0x1]
        %v842 = vlaneseq
        %v843 = vshrl.u32 %v842, 7
        %v844 = vsub.s32 0, %v843
        %v845 = vrot.slane %v840, %v844
        %v879 = vunpack.c.l.b16 %v808
        %v880 = vunpack.c.l.b16 %v809
        %v881 = vunpack.c.l.b16 %v810
        %v882 = vunpack.c.l.b16 %v811
        %v883 = vunpack.c.l.b16 %v812
        %v884 = vunpack.c.l.b16 %v813
        %v885 = vunpack.c.l.b16 %v814
        %v886 = vunpack.c.l.b16 %v815
        %v887 = vunpack.c.l.b16 %v816
        %v888 = vunpack.c.l.b16 %v817
        %v889 = vunpack.c.l.b16 %v818
        %v890 = vunpack.c.l.b16 %v819
        %v891 = vunpack.c.l.b16 %v820
        %v892 = vunpack.c.l.b16 %v821
        %v893 = vunpack.c.l.b16 %v822
        %v894 = vunpack.c.l.b16 %v823
        %v895 = vunpack.c.l.b16 %v824
        %v896 = vunpack.c.l.b16 %v825
        %v897 = vunpack.c.l.b16 %v826
        %v898 = vunpack.c.l.b16 %v827
        %v899 = vunpack.c.l.b16 %v828
        %v900 = vunpack.c.l.b16 %v829
        %v901 = vunpack.c.l.b16 %v830
        %v902 = vunpack.c.l.b16 %v831
        %v903 = vunpack.c.l.b16 %v832
        %v904 = vunpack.c.l.b16 %v833
        %v905 = vunpack.c.l.b16 %v834
        %v906 = vunpack.c.l.b16 %v835
        %v907 = vunpack.c.l.b16 %v836
        %v908 = vunpack.c.l.b16 %v837
        %v909 = vunpack.c.l.b16 %v838
        %v910 = vunpack.c.l.b16 %v839
        %v911 = vpack.c.b16 %v880, %v879
        %v912 = vpack.c.b16 %v882, %v881
        %v913 = vpack.c.b16 %v884, %v883
        %v914 = vpack.c.b16 %v886, %v885
        %v915 = vpack.c.b16 %v888, %v887
        %v916 = vpack.c.b16 %v890, %v889
        %v917 = vpack.c.b16 %v892, %v891
        %v918 = vpack.c.b16 %v894, %v893
        %v919 = vpack.c.b16 %v896, %v895
        %v920 = vpack.c.b16 %v898, %v897
        %v921 = vpack.c.b16 %v900, %v899
        %v922 = vpack.c.b16 %v902, %v901
        %v923 = vpack.c.b16 %v904, %v903
        %v924 = vpack.c.b16 %v906, %v905
        %v925 = vpack.c.b16 %v908, %v907
        %v926 = vpack.c.b16 %v910, %v909
        %943 = vmatprep.subr.bf16.mxu0 0
        %944 = vmatpush1.bf16.msra.mxu0 %v911
        %945 = vmatprep.subr.bf16.mxu0 0
        %946 = vmatpush1.bf16.msra.mxu0 %v912
        %947 = vmatprep.subr.bf16.mxu0 0
        %948 = vmatpush1.bf16.msra.mxu0 %v913
        %949 = vmatprep.subr.bf16.mxu0 0
        %950 = vmatpush1.bf16.msra.mxu0 %v914
        %951 = vmatprep.subr.bf16.mxu0 0
        %952 = vmatpush1.bf16.msra.mxu0 %v915
        %953 = vmatprep.subr.bf16.mxu0 0
        %954 = vmatpush1.bf16.msra.mxu0 %v916
        %955 = vmatprep.subr.bf16.mxu0 0
        %956 = vmatpush1.bf16.msra.mxu0 %v917
        %957 = vmatprep.subr.bf16.mxu0 0
        %958 = vmatpush1.bf16.msra.mxu0 %v918
        %959 = vmatprep.subr.bf16.mxu0 0
        %960 = vmatpush1.bf16.msra.mxu0 %v919
        %961 = vmatprep.subr.bf16.mxu0 0
        %962 = vmatpush1.bf16.msra.mxu0 %v920
        %963 = vmatprep.subr.bf16.mxu0 0
        %964 = vmatpush1.bf16.msra.mxu0 %v921
        %965 = vmatprep.subr.bf16.mxu0 0
        %966 = vmatpush1.bf16.msra.mxu0 %v922
        %967 = vmatprep.subr.bf16.mxu0 0
        %968 = vmatpush1.bf16.msra.mxu0 %v923
        %969 = vmatprep.subr.bf16.mxu0 0
        %970 = vmatpush1.bf16.msra.mxu0 %v924
        %971 = vmatprep.subr.bf16.mxu0 0
        %972 = vmatpush1.bf16.msra.mxu0 %v925
        %973 = vmatprep.subr.bf16.mxu0 0
        %974 = vmatpush1.bf16.msra.mxu0 %v926
        %975 = vmatprep.mubr.bf16.mxu0 %v793
        %976 = vmatmul.mubr.bf16.gmra.mrb[0].mxu0 %v792
        %v977 = vpop.f32.mrb[0].mxu0
        %v978 = vadd.f32 %v845, %v977
        %v979 = vpop.f32.mrb[0].mxu0
        %v980 = vpop.f32.mrb[0].mxu0
        %v981 = vadd.f32 %v845, %v980
        %v982 = vpop.f32.mrb[0].mxu0
        %983 = vmatprep.mubr.bf16.mxu0 %v795
        %984 = vmatmul.mubr.bf16.gmra.mrb[0].mxu0 %v794
        %v985 = vpop.f32.mrb[0].mxu0
        %v986 = vadd.f32 %v845, %v985
        %v987 = vpop.f32.mrb[0].mxu0
        %v988 = vpop.f32.mrb[0].mxu0
        %v989 = vadd.f32 %v845, %v988
        %v990 = vpop.f32.mrb[0].mxu0
        %991 = vmatprep.mubr.bf16.mxu0 %v797
        %992 = vmatmul.mubr.bf16.gmra.mrb[0].mxu0 %v796
        %v993 = vpop.f32.mrb[0].mxu0
        %v994 = vadd.f32 %v845, %v993
        %v995 = vpop.f32.mrb[0].mxu0
        %v996 = vpop.f32.mrb[0].mxu0
        %v997 = vadd.f32 %v845, %v996
        %v998 = vpop.f32.mrb[0].mxu0
        %999 = vmatprep.mubr.bf16.mxu0 %v799
        %1000 = vmatmul.mubr.bf16.gmra.mrb[0].mxu0 %v798
        %v1001 = vpop.f32.mrb[0].mxu0
        %v1002 = vadd.f32 %v845, %v1001
        %v1003 = vpop.f32.mrb[0].mxu0
        %v1004 = vpop.f32.mrb[0].mxu0
        %v1005 = vadd.f32 %v845, %v1004
        %v1006 = vpop.f32.mrb[0].mxu0
        %1007 = vmatprep.mubr.bf16.mxu0 %v801
        %1008 = vmatmul.mubr.bf16.gmra.mrb[0].mxu0 %v800
        %v1009 = vpop.f32.mrb[0].mxu0
        %v1010 = vadd.f32 %v845, %v1009
        %v1011 = vpop.f32.mrb[0].mxu0
        %v1012 = vpop.f32.mrb[0].mxu0
        %v1013 = vadd.f32 %v845, %v1012
        %v1014 = vpop.f32.mrb[0].mxu0
        %1015 = vmatprep.mubr.bf16.mxu0 %v803
        %1016 = vmatmul.mubr.bf16.gmra.mrb[0].mxu0 %v802
        %v1017 = vpop.f32.mrb[0].mxu0
        %v1018 = vadd.f32 %v845, %v1017
        %v1019 = vpop.f32.mrb[0].mxu0
        %v1020 = vpop.f32.mrb[0].mxu0
        %v1021 = vadd.f32 %v845, %v1020
        %v1022 = vpop.f32.mrb[0].mxu0
        %1023 = vmatprep.mubr.bf16.mxu0 %v805
        %1024 = vmatmul.mubr.bf16.gmra.mrb[0].mxu0 %v804
        %v1025 = vpop.f32.mrb[0].mxu0
        %v1026 = vadd.f32 %v845, %v1025
        %v1027 = vpop.f32.mrb[0].mxu0
        %v1028 = vpop.f32.mrb[0].mxu0
        %v1029 = vadd.f32 %v845, %v1028
        %v1030 = vpop.f32.mrb[0].mxu0
        %1031 = vmatprep.mubr.bf16.mxu0 %v807
        %1032 = vmatmul.mubr.bf16.gmra.mrb[0].mxu0 %v806
        %v1033 = vpop.f32.mrb[0].mxu0
        %v1034 = vadd.f32 %v845, %v1033
        %v1035 = vpop.f32.mrb[0].mxu0
        %v1036 = vpop.f32.mrb[0].mxu0
        %v1037 = vadd.f32 %v845, %v1036
        %v1038 = vpop.f32.mrb[0].mxu0
        %1039 = vdwg.mxu0
        %v1040 = vmax.f32 %v978, 0.0
        %v1041 = vmax.f32 %v981, 0.0
        %v1042 = vmax.f32 %v986, 0.0
        %v1043 = vmax.f32 %v989, 0.0
        %v1044 = vmax.f32 %v994, 0.0
        %v1045 = vmax.f32 %v997, 0.0
        %v1046 = vmax.f32 %v1002, 0.0
        %v1047 = vmax.f32 %v1005, 0.0
        %v1048 = vmax.f32 %v1010, 0.0
        %v1049 = vmax.f32 %v1013, 0.0
        %v1050 = vmax.f32 %v1018, 0.0
        %v1051 = vmax.f32 %v1021, 0.0
        %v1052 = vmax.f32 %v1026, 0.0
        %v1053 = vmax.f32 %v1029, 0.0
        %v1054 = vmax.f32 %v1034, 0.0
        %v1055 = vmax.f32 %v1037, 0.0
        %v1056 = vpack.c.bf16 %v1041, %v1040
        %v1057 = vpack.c.bf16 %v1043, %v1042
        %v1058 = vpack.c.bf16 %v1045, %v1044
        %v1059 = vpack.c.bf16 %v1047, %v1046
        %v1060 = vpack.c.bf16 %v1049, %v1048
        %v1061 = vpack.c.bf16 %v1051, %v1050
        %v1062 = vpack.c.bf16 %v1053, %v1052
        %v1063 = vpack.c.bf16 %v1055, %v1054
        %v1064 = vld [vmem:[%s5] sm:$0xf]
        %v1065 = vld [vmem:[%s5 + $0x4] sm:$0xf]
        %v1066 = vld [vmem:[%s5 + $0x8] sm:$0xf]
        %v1067 = vld [vmem:[%s5 + $0xc] sm:$0xf]
        %v1068 = vld [vmem:[%s5 + $0x10] sm:$0xf]
        %v1069 = vld [vmem:[%s5 + $0x14] sm:$0xf]
        %v1070 = vld [vmem:[%s5 + $0x18] sm:$0xf]
        %v1071 = vld [vmem:[%s5 + $0x1c] sm:$0xf]
        %v1072 = vld [vmem:[%s5 + $0x20] sm:$0xf]
        %v1073 = vld [vmem:[%s5 + $0x24] sm:$0xf]
        %v1074 = vld [vmem:[%s5 + $0x28] sm:$0xf]
        %v1075 = vld [vmem:[%s5 + $0x2c] sm:$0xf]
        %v1076 = vld [vmem:[%s5 + $0x30] sm:$0xf]
        %v1077 = vld [vmem:[%s5 + $0x34] sm:$0xf]
        %v1078 = vld [vmem:[%s5 + $0x38] sm:$0xf]
        %v1079 = vld [vmem:[%s5 + $0x3c] sm:$0xf]
        %v1080 = vld [vmem:[%s6] sm:$0x1]
        %v1082 = vlaneseq
        %v1083 = vshrl.u32 %v1082, 7
        %v1084 = vsub.s32 0, %v1083
        %v1085 = vrot.slane %v1080, %v1084
        %v1103 = vunpack.c.l.b16 %v1064
        %v1104 = vunpack.c.l.b16 %v1065
        %v1105 = vunpack.c.l.b16 %v1066
        %v1106 = vunpack.c.l.b16 %v1067
        %v1107 = vunpack.c.l.b16 %v1068
        %v1108 = vunpack.c.l.b16 %v1069
        %v1109 = vunpack.c.l.b16 %v1070
        %v1110 = vunpack.c.l.b16 %v1071
        %v1111 = vunpack.c.l.b16 %v1072
        %v1112 = vunpack.c.l.b16 %v1073
        %v1113 = vunpack.c.l.b16 %v1074
        %v1114 = vunpack.c.l.b16 %v1075
        %v1115 = vunpack.c.l.b16 %v1076
        %v1116 = vunpack.c.l.b16 %v1077
        %v1117 = vunpack.c.l.b16 %v1078
        %v1118 = vunpack.c.l.b16 %v1079
        %v1119 = vpack.c.b16 %v1104, %v1103
        %v1120 = vpack.c.b16 %v1106, %v1105
        %v1121 = vpack.c.b16 %v1108, %v1107
        %v1122 = vpack.c.b16 %v1110, %v1109
        %v1123 = vpack.c.b16 %v1112, %v1111
        %v1124 = vpack.c.b16 %v1114, %v1113
        %v1125 = vpack.c.b16 %v1116, %v1115
        %v1126 = vpack.c.b16 %v1118, %v1117
        %1135 = vmatprep.subr.bf16.mxu0 0
        %1136 = vmatpush1.bf16.msra.mxu0 %v1119
        %1137 = vmatprep.subr.bf16.mxu0 0
        %1138 = vmatpush1.bf16.msra.mxu0 %v1120
        %1139 = vmatprep.subr.bf16.mxu0 0
        %1140 = vmatpush1.bf16.msra.mxu0 %v1121
        %1141 = vmatprep.subr.bf16.mxu0 0
        %1142 = vmatpush1.bf16.msra.mxu0 %v1122
        %1143 = vmatprep.subr.bf16.mxu0 0
        %1144 = vmatpush1.bf16.msra.mxu0 %v1123
        %1145 = vmatprep.subr.bf16.mxu0 0
        %1146 = vmatpush1.bf16.msra.mxu0 %v1124
        %1147 = vmatprep.subr.bf16.mxu0 0
        %1148 = vmatpush1.bf16.msra.mxu0 %v1125
        %1149 = vmatprep.subr.bf16.mxu0 0
        %1150 = vmatpush1.bf16.msra.mxu0 %v1126
        %1151 = vmatprep.subr.bf16.mxu0 0
        %1152 = vmatpush1.bf16.msra.mxu0 0
        %1153 = vmatprep.subr.bf16.mxu0 0
        %1154 = vmatpush1.bf16.msra.mxu0 0
        %1155 = vmatprep.subr.bf16.mxu0 0
        %1156 = vmatpush1.bf16.msra.mxu0 0
        %1157 = vmatprep.subr.bf16.mxu0 0
        %1158 = vmatpush1.bf16.msra.mxu0 0
        %1159 = vmatprep.subr.bf16.mxu0 0
        %1160 = vmatpush1.bf16.msra.mxu0 0
        %1161 = vmatprep.subr.bf16.mxu0 0
        %1162 = vmatpush1.bf16.msra.mxu0 0
        %1163 = vmatprep.subr.bf16.mxu0 0
        %1164 = vmatpush1.bf16.msra.mxu0 0
        %1165 = vmatprep.subr.bf16.mxu0 0
        %1166 = vmatpush1.bf16.msra.mxu0 0
        %1167 = vmatprep.mubr.bf16.mxu0 0
        %1168 = vmatmul.mubr.bf16.gmra.mrb[0].mxu0 %v1056
        %v1169 = vpop.f32.mrb[0].mxu0
        %v1170 = vadd.f32 %v1085, %v1169
        %v1171 = vpop.f32.mrb[0].mxu0
        %v1172 = vpop.f32.mrb[0].mxu0
        %v1173 = vadd.f32 %v1085, %v1172
        %v1174 = vpop.f32.mrb[0].mxu0
        %1175 = vmatprep.mubr.bf16.mxu0 0
        %1176 = vmatmul.mubr.bf16.gmra.mrb[0].mxu0 %v1057
        %v1177 = vpop.f32.mrb[0].mxu0
        %v1178 = vadd.f32 %v1085, %v1177
        %v1179 = vpop.f32.mrb[0].mxu0
        %v1180 = vpop.f32.mrb[0].mxu0
        %v1181 = vadd.f32 %v1085, %v1180
        %v1182 = vpop.f32.mrb[0].mxu0
        %1183 = vmatprep.mubr.bf16.mxu0 0
        %1184 = vmatmul.mubr.bf16.gmra.mrb[0].mxu0 %v1058
        %v1185 = vpop.f32.mrb[0].mxu0
        %v1186 = vadd.f32 %v1085, %v1185
        %v1187 = vpop.f32.mrb[0].mxu0
        %v1188 = vpop.f32.mrb[0].mxu0
        %v1189 = vadd.f32 %v1085, %v1188
        %v1190 = vpop.f32.mrb[0].mxu0
        %1191 = vmatprep.mubr.bf16.mxu0 0
        %1192 = vmatmul.mubr.bf16.gmra.mrb[0].mxu0 %v1059
        %v1193 = vpop.f32.mrb[0].mxu0
        %v1194 = vadd.f32 %v1085, %v1193
        %v1195 = vpop.f32.mrb[0].mxu0
        %v1196 = vpop.f32.mrb[0].mxu0
        %v1197 = vadd.f32 %v1085, %v1196
        %v1198 = vpop.f32.mrb[0].mxu0
        %1199 = vmatprep.mubr.bf16.mxu0 0
        %1200 = vmatmul.mubr.bf16.gmra.mrb[0].mxu0 %v1060
        %v1201 = vpop.f32.mrb[0].mxu0
        %v1202 = vadd.f32 %v1085, %v1201
        %v1203 = vpop.f32.mrb[0].mxu0
        %v1204 = vpop.f32.mrb[0].mxu0
        %v1205 = vadd.f32 %v1085, %v1204
        %v1206 = vpop.f32.mrb[0].mxu0
        %1207 = vmatprep.mubr.bf16.mxu0 0
        %1208 = vmatmul.mubr.bf16.gmra.mrb[0].mxu0 %v1061
        %v1209 = vpop.f32.mrb[0].mxu0
        %v1210 = vadd.f32 %v1085, %v1209
        %v1211 = vpop.f32.mrb[0].mxu0
        %v1212 = vpop.f32.mrb[0].mxu0
        %v1213 = vadd.f32 %v1085, %v1212
        %v1214 = vpop.f32.mrb[0].mxu0
        %1215 = vmatprep.mubr.bf16.mxu0 0
        %1216 = vmatmul.mubr.bf16.gmra.mrb[0].mxu0 %v1062
        %v1217 = vpop.f32.mrb[0].mxu0
        %v1218 = vadd.f32 %v1085, %v1217
        %v1219 = vpop.f32.mrb[0].mxu0
        %v1220 = vpop.f32.mrb[0].mxu0
        %v1221 = vadd.f32 %v1085, %v1220
        %v1222 = vpop.f32.mrb[0].mxu0
        %1223 = vmatprep.mubr.bf16.mxu0 0
        %1224 = vmatmul.mubr.bf16.gmra.mrb[0].mxu0 %v1063
        %v1225 = vpop.f32.mrb[0].mxu0
        %v1226 = vadd.f32 %v1085, %v1225
        %v1227 = vpop.f32.mrb[0].mxu0
        %v1228 = vpop.f32.mrb[0].mxu0
        %v1229 = vadd.f32 %v1085, %v1228
        %v1230 = vpop.f32.mrb[0].mxu0
        %1231 = vdwg.mxu0
        %v1232 = vmax.f32 %v1170, 0.0
        %v1233 = vmax.f32 %v1173, 0.0
        %v1234 = vmax.f32 %v1178, 0.0
        %v1235 = vmax.f32 %v1181, 0.0
        %v1236 = vmax.f32 %v1186, 0.0
        %v1237 = vmax.f32 %v1189, 0.0
        %v1238 = vmax.f32 %v1194, 0.0
        %v1239 = vmax.f32 %v1197, 0.0
        %v1240 = vmax.f32 %v1202, 0.0
        %v1241 = vmax.f32 %v1205, 0.0
        %v1242 = vmax.f32 %v1210, 0.0
        %v1243 = vmax.f32 %v1213, 0.0
        %v1244 = vmax.f32 %v1218, 0.0
        %v1245 = vmax.f32 %v1221, 0.0
        %v1246 = vmax.f32 %v1226, 0.0
        %v1247 = vmax.f32 %v1229, 0.0
        %v1248 = vpack.c.bf16 %v1233, %v1232
        %v1249 = vpack.c.bf16 %v1235, %v1234
        %v1250 = vpack.c.bf16 %v1237, %v1236
        %v1251 = vpack.c.bf16 %v1239, %v1238
        %v1252 = vpack.c.bf16 %v1241, %v1240
        %v1253 = vpack.c.bf16 %v1243, %v1242
        %v1254 = vpack.c.bf16 %v1245, %v1244
        %v1255 = vpack.c.bf16 %v1247, %v1246
        %v1256 = vld [vmem:[%s7] sm:$0xf]
        %v1257 = vld [vmem:[%s7 + $0x4] sm:$0xf]
        %v1258 = vld [vmem:[%s7 + $0x8] sm:$0xf]
        %v1259 = vld [vmem:[%s7 + $0xc] sm:$0xf]
        %v1260 = vld [vmem:[%s7 + $0x10] sm:$0xf]
        %v1261 = vld [vmem:[%s7 + $0x14] sm:$0xf]
        %v1262 = vld [vmem:[%s7 + $0x18] sm:$0xf]
        %v1263 = vld [vmem:[%s7 + $0x1c] sm:$0xf]
        %v1264 = vld [vmem:[%s8] sm:$0x1]
        %v1266 = vlaneseq
        %v1267 = vshrl.u32 %v1266, 7
        %v1268 = vsub.s32 0, %v1267
        %v1269 = vrot.slane %v1264, %v1268
        %v1279 = vunpack.c.l.b16 %v1256
        %v1280 = vunpack.c.l.b16 %v1257
        %v1281 = vunpack.c.l.b16 %v1258
        %v1282 = vunpack.c.l.b16 %v1259
        %v1283 = vunpack.c.l.b16 %v1260
        %v1284 = vunpack.c.l.b16 %v1261
        %v1285 = vunpack.c.l.b16 %v1262
        %v1286 = vunpack.c.l.b16 %v1263
        %v1287 = vpack.c.b16 %v1280, %v1279
        %v1288 = vpack.c.b16 %v1282, %v1281
        %v1289 = vpack.c.b16 %v1284, %v1283
        %v1290 = vpack.c.b16 %v1286, %v1285
        %vm1295 = vcmask 523264
        %v1297 = vsel %vm1295, %v1248, 0
        %v1300 = vsel %vm1295, %v1249, 0
        %v1303 = vsel %vm1295, %v1250, 0
        %v1306 = vsel %vm1295, %v1251, 0
        %v1309 = vsel %vm1295, %v1252, 0
        %v1312 = vsel %vm1295, %v1253, 0
        %v1315 = vsel %vm1295, %v1254, 0
        %v1318 = vsel %vm1295, %v1255, 0
        %1320 = vmatprep.subr.bf16.mxu0 0
        %1321 = vmatpush1.bf16.msra.mxu0 %v1287
        %1322 = vmatprep.subr.bf16.mxu0 0
        %1323 = vmatpush1.bf16.msra.mxu0 %v1288
        %1324 = vmatprep.subr.bf16.mxu0 0
        %1325 = vmatpush1.bf16.msra.mxu0 %v1289
        %1326 = vmatprep.subr.bf16.mxu0 0
        %1327 = vmatpush1.bf16.msra.mxu0 %v1290
        %1328 = vmatprep.subr.bf16.mxu0 0
        %1329 = vmatpush1.bf16.msra.mxu0 0
        %1330 = vmatprep.subr.bf16.mxu0 0
        %1331 = vmatpush1.bf16.msra.mxu0 0
        %1332 = vmatprep.subr.bf16.mxu0 0
        %1333 = vmatpush1.bf16.msra.mxu0 0
        %1334 = vmatprep.subr.bf16.mxu0 0
        %1335 = vmatpush1.bf16.msra.mxu0 0
        %1336 = vmatprep.subr.bf16.mxu0 0
        %1337 = vmatpush1.bf16.msra.mxu0 0
        %1338 = vmatprep.subr.bf16.mxu0 0
        %1339 = vmatpush1.bf16.msra.mxu0 0
        %1340 = vmatprep.subr.bf16.mxu0 0
        %1341 = vmatpush1.bf16.msra.mxu0 0
        %1342 = vmatprep.subr.bf16.mxu0 0
        %1343 = vmatpush1.bf16.msra.mxu0 0
        %1344 = vmatprep.subr.bf16.mxu0 0
        %1345 = vmatpush1.bf16.msra.mxu0 0
        %1346 = vmatprep.subr.bf16.mxu0 0
        %1347 = vmatpush1.bf16.msra.mxu0 0
        %1348 = vmatprep.subr.bf16.mxu0 0
        %1349 = vmatpush1.bf16.msra.mxu0 0
        %1350 = vmatprep.subr.bf16.mxu0 0
        %1351 = vmatpush1.bf16.msra.mxu0 0
        %1352 = vmatprep.mubr.bf16.mxu0 0
        %1353 = vmatmul.mubr.bf16.gmra.mrb[0].mxu0 %v1297
        %v1354 = vpop.f32.mrb[0].mxu0
        %v1355 = vadd.f32 %v1269, %v1354
        %v1356 = vpop.f32.mrb[0].mxu0
        %v1357 = vpop.f32.mrb[0].mxu0
        %v1358 = vadd.f32 %v1269, %v1357
        %v1359 = vpop.f32.mrb[0].mxu0
        %1360 = vmatprep.mubr.bf16.mxu0 0
        %1361 = vmatmul.mubr.bf16.gmra.mrb[0].mxu0 %v1300
        %v1362 = vpop.f32.mrb[0].mxu0
        %v1363 = vadd.f32 %v1269, %v1362
        %v1364 = vpop.f32.mrb[0].mxu0
        %v1365 = vpop.f32.mrb[0].mxu0
        %v1366 = vadd.f32 %v1269, %v1365
        %v1367 = vpop.f32.mrb[0].mxu0
        %1368 = vmatprep.mubr.bf16.mxu0 0
        %1369 = vmatmul.mubr.bf16.gmra.mrb[0].mxu0 %v1303
        %v1370 = vpop.f32.mrb[0].mxu0
        %v1371 = vadd.f32 %v1269, %v1370
        %v1372 = vpop.f32.mrb[0].mxu0
        %v1373 = vpop.f32.mrb[0].mxu0
        %v1374 = vadd.f32 %v1269, %v1373
        %v1375 = vpop.f32.mrb[0].mxu0
        %1376 = vmatprep.mubr.bf16.mxu0 0
        %1377 = vmatmul.mubr.bf16.gmra.mrb[0].mxu0 %v1306
        %v1378 = vpop.f32.mrb[0].mxu0
        %v1379 = vadd.f32 %v1269, %v1378
        %v1380 = vpop.f32.mrb[0].mxu0
        %v1381 = vpop.f32.mrb[0].mxu0
        %v1382 = vadd.f32 %v1269, %v1381
        %v1383 = vpop.f32.mrb[0].mxu0
        %1384 = vmatprep.mubr.bf16.mxu0 0
        %1385 = vmatmul.mubr.bf16.gmra.mrb[0].mxu0 %v1309
        %v1386 = vpop.f32.mrb[0].mxu0
        %v1387 = vadd.f32 %v1269, %v1386
        %v1388 = vpop.f32.mrb[0].mxu0
        %v1389 = vpop.f32.mrb[0].mxu0
        %v1390 = vadd.f32 %v1269, %v1389
        %v1391 = vpop.f32.mrb[0].mxu0
        %1392 = vmatprep.mubr.bf16.mxu0 0
        %1393 = vmatmul.mubr.bf16.gmra.mrb[0].mxu0 %v1312
        %v1394 = vpop.f32.mrb[0].mxu0
        %v1395 = vadd.f32 %v1269, %v1394
        %v1396 = vpop.f32.mrb[0].mxu0
        %v1397 = vpop.f32.mrb[0].mxu0
        %v1398 = vadd.f32 %v1269, %v1397
        %v1399 = vpop.f32.mrb[0].mxu0
        %1400 = vmatprep.mubr.bf16.mxu0 0
        %1401 = vmatmul.mubr.bf16.gmra.mrb[0].mxu0 %v1315
        %v1402 = vpop.f32.mrb[0].mxu0
        %v1403 = vadd.f32 %v1269, %v1402
        %v1404 = vpop.f32.mrb[0].mxu0
        %v1405 = vpop.f32.mrb[0].mxu0
        %v1406 = vadd.f32 %v1269, %v1405
        %v1407 = vpop.f32.mrb[0].mxu0
        %1408 = vmatprep.mubr.bf16.mxu0 0
        %1409 = vmatmul.mubr.bf16.gmra.mrb[0].mxu0 %v1318
        %v1410 = vpop.f32.mrb[0].mxu0
        %v1411 = vadd.f32 %v1269, %v1410
        %v1412 = vpop.f32.mrb[0].mxu0
        %v1413 = vpop.f32.mrb[0].mxu0
        %v1414 = vadd.f32 %v1269, %v1413
        %v1415 = vpop.f32.mrb[0].mxu0
        %1416 = vdwg.mxu0
        %v1417 = vtanh.pop %v1355
        %v1418 = vtanh.pop %v1358
        %v1419 = vtanh.pop %v1363
        %v1420 = vtanh.pop %v1366
        %v1421 = vtanh.pop %v1371
        %v1422 = vtanh.pop %v1374
        %v1423 = vtanh.pop %v1379
        %v1424 = vtanh.pop %v1382
        %v1425 = vtanh.pop %v1387
        %v1426 = vtanh.pop %v1390
        %v1427 = vtanh.pop %v1395
        %v1428 = vtanh.pop %v1398
        %v1429 = vtanh.pop %v1403
        %v1430 = vtanh.pop %v1406
        %v1431 = vtanh.pop %v1411
        %v1432 = vtanh.pop %v1414
        %v1433 = vld [vmem:[%s9] sm:$0x1]
        %v1434 = vld [vmem:[#allocation5] sm:$0x1]
        %1436 = vset.pattern.permute.xlu0 0
        %1437 = vperm.xlu0 %1436, %v1434
        %v1438 = vpop.permute.xlu0 %1437
        %v1440 = vlaneseq
        %v1441 = vshrl.u32 %v1440, 7
        %v1442 = vsub.s32 0, %v1441
        %v1443 = vrot.slane %v1438, %v1442
        %v1445 = vsel %vm1295, %v1433, 0
        %v1448 = vsel %vm1295, %v1417, 0
        %v1451 = vsel %vm1295, %v1418, 0
        %v1454 = vsel %vm1295, %v1419, 0
        %v1457 = vsel %vm1295, %v1420, 0
        %v1460 = vsel %vm1295, %v1421, 0
        %v1463 = vsel %vm1295, %v1422, 0
        %v1466 = vsel %vm1295, %v1423, 0
        %v1469 = vsel %vm1295, %v1424, 0
        %v1472 = vsel %vm1295, %v1425, 0
        %v1475 = vsel %vm1295, %v1426, 0
        %v1478 = vsel %vm1295, %v1427, 0
        %v1481 = vsel %vm1295, %v1428, 0
        %v1484 = vsel %vm1295, %v1429, 0
        %v1487 = vsel %vm1295, %v1430, 0
        %v1490 = vsel %vm1295, %v1431, 0
        %v1493 = vsel %vm1295, %v1432, 0
        %1495 = vmatprep.subr.mxu0 0.0
        %1496 = vmatpush1.xpose.msra.mxu0 %v1448
        %1497 = vmatprep.subr.mxu0 0.0
        %1498 = vmatpush1.xpose.msra.mxu0 %v1451
        %1499 = vmatprep.subr.mxu0 0.0
        %1500 = vmatpush1.xpose.msra.mxu0 %v1454
        %1501 = vmatprep.subr.mxu0 0.0
        %1502 = vmatpush1.xpose.msra.mxu0 %v1457
        %1503 = vmatprep.subr.mxu0 0.0
        %1504 = vmatpush1.xpose.msra.mxu0 %v1460
        %1505 = vmatprep.subr.mxu0 0.0
        %1506 = vmatpush1.xpose.msra.mxu0 %v1463
        %1507 = vmatprep.subr.mxu0 0.0
        %1508 = vmatpush1.xpose.msra.mxu0 %v1466
        %1509 = vmatprep.subr.mxu0 0.0
        %1510 = vmatpush1.xpose.msra.mxu0 %v1469
        %1511 = vmatprep.subr.mxu0 0.0
        %1512 = vmatpush1.xpose.msra.mxu0 %v1472
        %1513 = vmatprep.subr.mxu0 0.0
        %1514 = vmatpush1.xpose.msra.mxu0 %v1475
        %1515 = vmatprep.subr.mxu0 0.0
        %1516 = vmatpush1.xpose.msra.mxu0 %v1478
        %1517 = vmatprep.subr.mxu0 0.0
        %1518 = vmatpush1.xpose.msra.mxu0 %v1481
        %1519 = vmatprep.subr.mxu0 0.0
        %1520 = vmatpush1.xpose.msra.mxu0 %v1484
        %1521 = vmatprep.subr.mxu0 0.0
        %1522 = vmatpush1.xpose.msra.mxu0 %v1487
        %1523 = vmatprep.subr.mxu0 0.0
        %1524 = vmatpush1.xpose.msra.mxu0 %v1490
        %1525 = vmatprep.subr.mxu0 0.0
        %1526 = vmatpush1.xpose.msra.mxu0 %v1493
        %1527 = vmatprep.subr.mxu0 0.0
        %1528 = vmatpush1.xpose.msra.mxu0 0.0
        %1529 = vmatprep.subr.mxu0 0.0
        %1530 = vmatpush1.xpose.msra.mxu0 0.0
        %1531 = vmatprep.subr.mxu0 0.0
        %1532 = vmatpush1.xpose.msra.mxu0 0.0
        %1533 = vmatprep.subr.mxu0 0.0
        %1534 = vmatpush1.xpose.msra.mxu0 0.0
        %1535 = vmatprep.subr.mxu0 0.0
        %1536 = vmatpush1.xpose.msra.mxu0 0.0
        %1537 = vmatprep.subr.mxu0 0.0
        %1538 = vmatpush1.xpose.msra.mxu0 0.0
        %1539 = vmatprep.subr.mxu0 0.0
        %1540 = vmatpush1.xpose.msra.mxu0 0.0
        %1541 = vmatprep.subr.mxu0 0.0
        %1542 = vmatpush1.xpose.msra.mxu0 0.0
        %1543 = vmatprep.subr.mxu0 0.0
        %1544 = vmatpush1.xpose.msra.mxu0 0.0
        %1545 = vmatprep.subr.mxu0 0.0
        %1546 = vmatpush1.xpose.msra.mxu0 0.0
        %1547 = vmatprep.subr.mxu0 0.0
        %1548 = vmatpush1.xpose.msra.mxu0 0.0
        %1549 = vmatprep.subr.mxu0 0.0
        %1550 = vmatpush1.xpose.msra.mxu0 0.0
        %1551 = vmatprep.subr.mxu0 0.0
        %1552 = vmatpush1.xpose.msra.mxu0 0.0
        %1553 = vmatprep.subr.mxu0 0.0
        %1554 = vmatpush1.xpose.msra.mxu0 0.0
        %1555 = vmatprep.subr.mxu0 0.0
        %1556 = vmatpush1.xpose.msra.mxu0 0.0
        %1557 = vmatprep.subr.mxu0 0.0
        %1558 = vmatpush1.xpose.msra.mxu0 0.0
        %1559 = vmatprep.mubr.f32.mxu0 0.0
        %1560 = vmatmul.mubr.f32.gmra.mrb[0].mxu0 %v1445
        %v1561 = vpop.f32.mrb[0].mxu0
        %v1562 = vadd.f32 %v1443, %v1561
        %v1563 = vpop.f32.mrb[0].mxu0
        %1564 = vdwg.mxu0
        %v1565 = vlaneseq
        %v1566 = vand.u32 %v1565, 127
        %s1567 = smul.u32 %s34, 128
        %v1568 = vstv %s1567
        %v1569 = vadd.s32 %v1566, %v1568
        %vm1570 = vcmp.lt.s32.totalorder %v1569, 200
        %v1571 = vsel %vm1570, %v1562, -1e+30
        %v1572 = vld [vmem:[#allocation2] sm:$0x1]
        %vm1573 = vcmask 1040384
        %v1574 = vsel %vm1573, %v1571, -inf
        %1575 = vmax.xlane.f32.xlu0 %v1574
        %v1576 = vpop.xlane.xlu0 %1575
        %v1577 = vmax.f32 %v1572, %v1576
        %v1578 = vsub.f32 %v1572, %v1577
        %v1579 = vmul.f32 %v1578, 1.442695
        %v1580 = vpow.pop %v1579
        %1582 = vset.pattern.permute.xlu0 0
        %1583 = vperm.xlu0 %1582, %v1577
        %v1584 = vpop.permute.xlu0 %1583
        %v1586 = vlaneseq
        %v1587 = vshrl.u32 %v1586, 7
        %v1588 = vsub.s32 0, %v1587
        %v1589 = vrot.slane %v1584, %v1588
        %v1590 = vsub.f32 %v1571, %v1589
        %v1591 = vmul.f32 %v1590, 1.442695
        %v1592 = vpow.pop %v1591
        %v1593 = vld [vmem:[#allocation3] sm:$0x1]
        %v1594 = vmul.f32 %v1580, %v1593
        %v1595 = vsel %vm1573, %v1592, 0.0
        %1596 = vadd.xlane.f32.xlu0 %v1595
        %v1597 = vpop.xlane.xlu0 %1596
        %v1598 = vadd.f32 %v1594, %v1597
        %vm1599 = vcmask 0
        %1600 = vst.msk [vmem:[#allocation3] sm:$0x1] %vm1599, %v1598
        %v1601 = vld [vmem:[#allocation4] sm:$0x1]
        %1603 = vset.pattern.permute.xlu0 0
        %1604 = vperm.xlu0 %1603, %v1580
        %v1605 = vpop.permute.xlu0 %1604
        %v1607 = vlaneseq
        %v1608 = vshrl.u32 %v1607, 7
        %v1609 = vsub.s32 0, %v1608
        %v1610 = vrot.slane %v1605, %v1609
        %v1611 = vmul.f32 %v1610, %v1601
        %1612 = vmatprep.subr.mxu0 0.0
        %1613 = vmatpush1.msra.mxu0 %v1232
        %1614 = vmatprep.subr.mxu0 0.0
        %1615 = vmatpush1.msra.mxu0 %v1233
        %1616 = vmatprep.subr.mxu0 0.0
        %1617 = vmatpush1.msra.mxu0 %v1234
        %1618 = vmatprep.subr.mxu0 0.0
        %1619 = vmatpush1.msra.mxu0 %v1235
        %1620 = vmatprep.subr.mxu0 0.0
        %1621 = vmatpush1.msra.mxu0 %v1236
        %1622 = vmatprep.subr.mxu0 0.0
        %1623 = vmatpush1.msra.mxu0 %v1237
        %1624 = vmatprep.subr.mxu0 0.0
        %1625 = vmatpush1.msra.mxu0 %v1238
        %1626 = vmatprep.subr.mxu0 0.0
        %1627 = vmatpush1.msra.mxu0 %v1239
        %1628 = vmatprep.subr.mxu0 0.0
        %1629 = vmatpush1.msra.mxu0 %v1240
        %1630 = vmatprep.subr.mxu0 0.0
        %1631 = vmatpush1.msra.mxu0 %v1241
        %1632 = vmatprep.subr.mxu0 0.0
        %1633 = vmatpush1.msra.mxu0 %v1242
        %1634 = vmatprep.subr.mxu0 0.0
        %1635 = vmatpush1.msra.mxu0 %v1243
        %1636 = vmatprep.subr.mxu0 0.0
        %1637 = vmatpush1.msra.mxu0 %v1244
        %1638 = vmatprep.subr.mxu0 0.0
        %1639 = vmatpush1.msra.mxu0 %v1245
        %1640 = vmatprep.subr.mxu0 0.0
        %1641 = vmatpush1.msra.mxu0 %v1246
        %1642 = vmatprep.subr.mxu0 0.0
        %1643 = vmatpush1.msra.mxu0 %v1247
        %1644 = vmatprep.subr.mxu0 0.0
        %1645 = vmatpush1.msra.mxu0 0.0
        %1646 = vmatprep.subr.mxu0 0.0
        %1647 = vmatpush1.msra.mxu0 0.0
        %1648 = vmatprep.subr.mxu0 0.0
        %1649 = vmatpush1.msra.mxu0 0.0
        %1650 = vmatprep.subr.mxu0 0.0
        %1651 = vmatpush1.msra.mxu0 0.0
        %1652 = vmatprep.subr.mxu0 0.0
        %1653 = vmatpush1.msra.mxu0 0.0
        %1654 = vmatprep.subr.mxu0 0.0
        %1655 = vmatpush1.msra.mxu0 0.0
        %1656 = vmatprep.subr.mxu0 0.0
        %1657 = vmatpush1.msra.mxu0 0.0
        %1658 = vmatprep.subr.mxu0 0.0
        %1659 = vmatpush1.msra.mxu0 0.0
        %1660 = vmatprep.subr.mxu0 0.0
        %1661 = vmatpush1.msra.mxu0 0.0
        %1662 = vmatprep.subr.mxu0 0.0
        %1663 = vmatpush1.msra.mxu0 0.0
        %1664 = vmatprep.subr.mxu0 0.0
        %1665 = vmatpush1.msra.mxu0 0.0
        %1666 = vmatprep.subr.mxu0 0.0
        %1667 = vmatpush1.msra.mxu0 0.0
        %1668 = vmatprep.subr.mxu0 0.0
        %1669 = vmatpush1.msra.mxu0 0.0
        %1670 = vmatprep.subr.mxu0 0.0
        %1671 = vmatpush1.msra.mxu0 0.0
        %1672 = vmatprep.subr.mxu0 0.0
        %1673 = vmatpush1.msra.mxu0 0.0
        %1674 = vmatprep.subr.mxu0 0.0
        %1675 = vmatpush1.msra.mxu0 0.0
        %1676 = vmatprep.mubr.f32.mxu0 0.0
        %1677 = vmatmul.mubr.f32.gmra.mrb[0].mxu0 %v1592
        %v1678 = vpop.f32.mrb[0].mxu0
        %v1679 = vadd.f32 0.0, %v1678
        %v1680 = vpop.f32.mrb[0].mxu0
        %1681 = vdwg.mxu0
        %v1682 = vadd.f32 %v1611, %v1679
        %vm1683 = vcmask 516096
        %1684 = vst.msk [vmem:[#allocation4] sm:$0x1] %vm1683, %v1682
        %1685 = vst.msk [vmem:[#allocation2] sm:$0x1] %vm1599, %v1577
        %s1686 = scalar_lea.vmem [#allocation13], %s34
        %1687 = vst [vmem:[%s1686] sm:$0x1] %v1571
        %p1688 = scmp.eq.s32.totalorder %s34, 1
        // Predicated region
        $region89: #{tpu_custom_call.1} parent=71 // pred_check
          %p1689 = pneg %p1688
        $region90: #{tpu_custom_call.1} parent=71 // pred_check_branch
          %1691 = sbr.rel (%p1689) target = $region92
        $region91: #{tpu_custom_call.1} parent=71 // pred_region
          %v1692 = vld [vmem:[#allocation3] sm:$0x1]
          %v1693 = vrcp.pop %v1692
          %v1694 = vld [vmem:[#allocation13] sm:$0x3]
          %v1695 = vld [vmem:[#allocation2] sm:$0x1]
          %v1697 = vlaneseq
          %v1698 = vshrl.u32 %v1697, 7
          %v1699 = vsub.s32 0, %v1698
          %v1700 = vrot.slane %v1695, %v1699
          %1701 = vset.pattern.permute.xlu0 0
          %1702 = vperm.xlu0 %1701, %v1700
          %v1703 = vpop.permute.xlu0 %1702
          %v1705 = vsub.f32 %v1694, %v1703
          %v1706 = vmul.f32 %v1705, 1.442695
          %v1707 = vpow.pop %v1706
          %v1709 = vlaneseq
          %v1710 = vshrl.u32 %v1709, 7
          %v1711 = vsub.s32 0, %v1710
          %v1712 = vrot.slane %v1693, %v1711
          %1713 = vset.pattern.permute.xlu0 0
          %1714 = vperm.xlu0 %1713, %v1712
          %v1715 = vpop.permute.xlu0 %1714
          %v1717 = vmul.f32 %v1707, %v1715
          %1718 = vst [vmem:[#allocation13] sm:$0x3] %v1717
          %v1719 = vld [vmem:[#allocation4] sm:$0x1]
          %1720 = vset.pattern.permute.xlu0 0
          %1721 = vperm.xlu0 %1720, %v1693
          %v1722 = vpop.permute.xlu0 %1721
          %v1724 = vlaneseq
          %v1725 = vshrl.u32 %v1724, 7
          %v1726 = vsub.s32 0, %v1725
          %v1727 = vrot.slane %v1722, %v1726
          %v1728 = vmul.f32 %v1719, %v1727
          %v1729 = vld [vmem:[%s11] sm:$0xff]
          %v1730 = vld [vmem:[%s11 + $0x8] sm:$0xff]
          %v1731 = vld [vmem:[%s11 + $0x10] sm:$0xff]
          %v1732 = vld [vmem:[%s11 + $0x18] sm:$0xff]
          %v1733 = vld [vmem:[%s11 + $0x20] sm:$0xff]
          %v1734 = vld [vmem:[%s11 + $0x28] sm:$0xff]
          %v1735 = vld [vmem:[%s11 + $0x30] sm:$0xff]
          %v1736 = vld [vmem:[%s11 + $0x38] sm:$0xff]
          %v1737 = vld [vmem:[%s12] sm:$0x1]
          %v1739 = vsel %vm1295, %v1728, 0
          %1741 = vmatprep.subr.mxu0 0.0
          %1742 = vmatpush1.msra.mxu0 %v1729
          %1743 = vmatprep.subr.mxu0 0.0
          %1744 = vmatpush1.msra.mxu0 %v1730
          %1745 = vmatprep.subr.mxu0 0.0
          %1746 = vmatpush1.msra.mxu0 %v1731
          %1747 = vmatprep.subr.mxu0 0.0
          %1748 = vmatpush1.msra.mxu0 %v1732
          %1749 = vmatprep.subr.mxu0 0.0
          %1750 = vmatpush1.msra.mxu0 %v1733
          %1751 = vmatprep.subr.mxu0 0.0
          %1752 = vmatpush1.msra.mxu0 %v1734
          %1753 = vmatprep.subr.mxu0 0.0
          %1754 = vmatpush1.msra.mxu0 %v1735
          %1755 = vmatprep.subr.mxu0 0.0
          %1756 = vmatpush1.msra.mxu0 %v1736
          %1757 = vmatprep.subr.mxu0 0.0
          %1758 = vmatpush1.msra.mxu0 0.0
          %1759 = vmatprep.subr.mxu0 0.0
          %1760 = vmatpush1.msra.mxu0 0.0
          %1761 = vmatprep.subr.mxu0 0.0
          %1762 = vmatpush1.msra.mxu0 0.0
          %1763 = vmatprep.subr.mxu0 0.0
          %1764 = vmatpush1.msra.mxu0 0.0
          %1765 = vmatprep.subr.mxu0 0.0
          %1766 = vmatpush1.msra.mxu0 0.0
          %1767 = vmatprep.subr.mxu0 0.0
          %1768 = vmatpush1.msra.mxu0 0.0
          %1769 = vmatprep.subr.mxu0 0.0
          %1770 = vmatpush1.msra.mxu0 0.0
          %1771 = vmatprep.subr.mxu0 0.0
          %1772 = vmatpush1.msra.mxu0 0.0
          %1773 = vmatprep.subr.mxu0 0.0
          %1774 = vmatpush1.msra.mxu0 0.0
          %1775 = vmatprep.subr.mxu0 0.0
          %1776 = vmatpush1.msra.mxu0 0.0
          %1777 = vmatprep.subr.mxu0 0.0
          %1778 = vmatpush1.msra.mxu0 0.0
          %1779 = vmatprep.subr.mxu0 0.0
          %1780 = vmatpush1.msra.mxu0 0.0
          %1781 = vmatprep.subr.mxu0 0.0
          %1782 = vmatpush1.msra.mxu0 0.0
          %1783 = vmatprep.subr.mxu0 0.0
          %1784 = vmatpush1.msra.mxu0 0.0
          %1785 = vmatprep.subr.mxu0 0.0
          %1786 = vmatpush1.msra.mxu0 0.0
          %1787 = vmatprep.subr.mxu0 0.0
          %1788 = vmatpush1.msra.mxu0 0.0
          %1789 = vmatprep.subr.mxu0 0.0
          %1790 = vmatpush1.msra.mxu0 0.0
          %1791 = vmatprep.subr.mxu0 0.0
          %1792 = vmatpush1.msra.mxu0 0.0
          %1793 = vmatprep.subr.mxu0 0.0
          %1794 = vmatpush1.msra.mxu0 0.0
          %1795 = vmatprep.subr.mxu0 0.0
          %1796 = vmatpush1.msra.mxu0 0.0
          %1797 = vmatprep.subr.mxu0 0.0
          %1798 = vmatpush1.msra.mxu0 0.0
          %1799 = vmatprep.subr.mxu0 0.0
          %1800 = vmatpush1.msra.mxu0 0.0
          %1801 = vmatprep.subr.mxu0 0.0
          %1802 = vmatpush1.msra.mxu0 0.0
          %1803 = vmatprep.subr.mxu0 0.0
          %1804 = vmatpush1.msra.mxu0 0.0
          %1805 = vmatprep.mubr.f32.mxu0 0.0
          %1806 = vmatmul.mubr.f32.gmra.mrb[0].mxu0 %v1739
          %v1807 = vpop.f32.mrb[0].mxu0
          %v1808 = vadd.f32 %v1737, %v1807
          %v1809 = vpop.f32.mrb[0].mxu0
          %1810 = vdwg.mxu0
          %1811 = vst [vmem:[#allocation12] sm:$0x1] %v1808
        $region92: #{tpu_custom_call.1} parent=71 // pred_fallthru
          _
        // Predicated region
        $region93: #{tpu_custom_call.1} parent=71 // pred_check
          %p1812 = pneg %p325
        $region94: #{tpu_custom_call.1} parent=71 // pred_check_branch
          %1814 = sbr.rel (%p1812) target = $region96
        $region95: #{tpu_custom_call.1} parent=71 // pred_region
          %s1816 = ssub.s32 16, 16
          %1817 = vsyncadd [#allocation8], %s1816
          %s1819 = sshll.u32 [#allocation12], 4
          %s1820 = int_to_ptr.vmem [resolvable:$true] %s1819
          %1822 = dma.vmem_to_hbm [thread:$0]  %s1820, 16, %s13, [#allocation8]
        $region96: #{tpu_custom_call.1} parent=71 // pred_fallthru
          _
        // Predicated region
        $region97: #{tpu_custom_call.1} parent=71 // pred_check
          %p1823 = pneg %p346
        $region98: #{tpu_custom_call.1} parent=71 // pred_check_branch
          %1825 = sbr.rel (%p1823) target = $region100
        $region99: #{tpu_custom_call.1} parent=71 // pred_region
          %s1827 = ssub.s32 32, 32
          %1828 = vsyncadd [#allocation14], %s1827
          %s1830 = sshll.u32 [#allocation13], 4
          %s1831 = int_to_ptr.vmem [resolvable:$true] %s1830
          %1833 = dma.vmem_to_hbm [thread:$0]  %s1831, 32, %s14, [#allocation14]
        $region100: #{tpu_custom_call.1} parent=71 // pred_fallthru
          _
        // Predicated region
        $region101: #{tpu_custom_call.1} parent=71 // pred_check
          %p1834 = pneg %p325
        $region102: #{tpu_custom_call.1} parent=71 // pred_check_branch
          %1836 = sbr.rel (%p1834) target = $region104
        $region103: #{tpu_custom_call.1} parent=71 // pred_region
          %1837 = dma.done [#allocation8], 16
        $region104: #{tpu_custom_call.1} parent=71 // pred_fallthru
          _
        // Predicated region
        $region105: #{tpu_custom_call.1} parent=71 // pred_check
          %p1838 = pneg %p346
        $region106: #{tpu_custom_call.1} parent=71 // pred_check_branch
          %1840 = sbr.rel (%p1838) target = $region108
        $region107: #{tpu_custom_call.1} parent=71 // pred_region
          %1841 = dma.done [#allocation14], 32
        $region108: #{tpu_custom_call.1} parent=71 // pred_fallthru
          _
      $region72: #{tpu_custom_call.1} parent=5 // pred_fallthru
        _
      %p1842 = scmp.le.s32.totalorder 2, %s29
      // Predicated region
      $region109: #{tpu_custom_call.1} parent=5 // pred_check
        %p1843 = pneg %p1842
      $region110: #{tpu_custom_call.1} parent=5 // pred_check_branch
        %1845 = sbr.rel (%p1843) target = $region112
      $region111: #{tpu_custom_call.1} parent=5 // pred_region
        %s1846 = ssub.s32 %s29, 2
      $region112: #{tpu_custom_call.1} parent=5 // pred_fallthru
        _
    $region6: #{tpu_custom_call.1} parent=1 // loop_footer
      %s33 = sadd.s32 1, %s29
    $region7: #{tpu_custom_call.1} parent=1 // loop_footer_branch
      %28 = sbr.rel target = $region3
    $region8: #{tpu_custom_call.1} parent=1 // loop_exit
      _
    %1847 = vsyncpa [#allocation7], 1
    %s1848 = scalar_lea.sflag [#allocation7], 1
    %1849 = vsyncpa %s1848, 1
    %1850 = vsyncpa [#allocation10], 1
    %1851 = vsyncpa [#allocation8], 1
    %s1852 = scalar_lea.sflag [#allocation8], 1
    %1853 = vsyncpa %s1852, 1
    %1854 = vsyncpa [#allocation14], 1

</llo_original>
